<compile_context>
chip_gen: v5e
topology: v5e:2x2
jax: 0.10.0
libtpu: 0.0.40
codegen_flags: <defaults>
</compile_context>

<pallas_src>
import functools

import jax
import jax.numpy as jnp
from jax.experimental import pallas as pl
from jax.experimental.pallas import tpu as pltpu


C1 = 32   # conv1 output channels
C2 = 64   # conv2 output channels


# ----------------------------------------------------------------------------
# Single fused kernel: conv1 -> pool -> conv2 -> pool -> flatten -> 4-layer MLP
# ----------------------------------------------------------------------------
def _net_kernel(xcol_ref, w1_ref, b1_ref, w2_ref, b2_ref,
                wf1_ref, bf1_ref, wf2_ref, bf2_ref,
                wf3_ref, bf3_ref, wf4_ref, bf4_ref,
                o_ref,
                y1_ref, r1_ref, xpad2_ref, y2_ref, r2_ref,
                *, N, H, W):
    H2, W2 = H // 2, W // 2          # spatial size after pool1 (= conv2 size)
    H3, W3 = H2 // 2, W2 // 2        # spatial size after pool2

    # -------- conv1: one im2col matmul on the MXU + bias + ReLU -----------
    # xcol_ref: (N*H*W, 9*3) patches; w1_ref: (27, C1)
    a1 = jnp.dot(xcol_ref[...], w1_ref[...],
                 preferred_element_type=jnp.float32) + b1_ref[...]
    a1 = jnp.maximum(a1, 0.0)                                    # (N*H*W, C1)
    y1_ref[...] = a1.reshape(N * H, W, C1)

    # -------- maxpool 2x2 stride 2 (rows via strided reads, then cols) ----
    r1_ref[...] = jnp.maximum(y1_ref[pl.ds(0, N * H2, 2)],
                              y1_ref[pl.ds(1, N * H2, 2)])       # (N*H2, W, C1)
    pool1 = jnp.maximum(r1_ref[:, pl.ds(0, W2, 2), :],
                        r1_ref[:, pl.ds(1, W2, 2), :])           # (N*H2, W2, C1)

    # -------- conv2: zero-pad in VMEM scratch, im2col, one matmul ---------
    xpad2_ref[...] = jnp.zeros_like(xpad2_ref)
    xpad2_ref[:, pl.ds(1, H2), pl.ds(1, W2), :] = pool1.reshape(N, H2, W2, C1)

    taps = []
    for ky in range(3):
        for kx in range(3):
            taps.append(xpad2_ref[:, ky:ky + H2, kx:kx + W2, :])  # (N,H2,W2,C1)
    patches2 = jnp.concatenate(taps, axis=-1).reshape(N * H2 * W2, 9 * C1)
    a2 = jnp.dot(patches2, w2_ref[...],
                 preferred_element_type=jnp.float32) + b2_ref[...]
    a2 = jnp.maximum(a2, 0.0)                                    # (N*H2*W2, C2)
    y2_ref[...] = a2.reshape(N * H2, W2, C2)

    # -------- pool2 + lane-dense flatten (torch NCHW order via wf1 rows) --
    rp = jnp.maximum(y2_ref[pl.ds(0, N * H3, 2)],
                     y2_ref[pl.ds(1, N * H3, 2)])                # (N*H3, W2, C2)
    r2_ref[...] = rp.reshape(N, H3, W2, C2)
    pieces = []
    for h in range(H3):
        for w in range(W3):
            pieces.append(jnp.maximum(r2_ref[:, h, 2 * w, :],
                                      r2_ref[:, h, 2 * w + 1, :]))  # (N, C2)
    flat = jnp.concatenate(pieces, axis=-1)          # (N, H3*W3*C2), (h,w,c)

    # -------- MLP head: relu(fc1) -> relu(fc2) -> relu(fc3) -> fc4 --------
    h1 = jnp.maximum(
        jnp.dot(flat, wf1_ref[...], preferred_element_type=jnp.float32)
        + bf1_ref[...], 0.0)
    h2 = jnp.maximum(
        jnp.dot(h1, wf2_ref[...], preferred_element_type=jnp.float32)
        + bf2_ref[...], 0.0)
    h3 = jnp.maximum(
        jnp.dot(h2, wf3_ref[...], preferred_element_type=jnp.float32)
        + bf3_ref[...], 0.0)
    o_ref[...] = (jnp.dot(h3, wf4_ref[...], preferred_element_type=jnp.float32)
                  + bf4_ref[...])


# ----------------------------------------------------------------------------
# Forward pass: tiny XLA prologue (transpose/pad/im2col on the 6 KB input) +
# one fused pallas_call.
# ----------------------------------------------------------------------------
@jax.jit
def net_forward(x_nchw, kp):
    N, _, H, W = x_nchw.shape
    H2, W2, H3 = H // 2, W // 2, H // 4

    # conv1 im2col patches, ky-major / kx / cin order (matches kp["w1"] rows).
    x = jnp.transpose(x_nchw, (0, 2, 3, 1))                      # NCHW -> NHWC
    xp = jnp.pad(x, ((0, 0), (1, 1), (1, 1), (0, 0)))            # padding=1
    taps = [xp[:, ky:ky + H, kx:kx + W, :]
            for ky in range(3) for kx in range(3)]
    xcol = jnp.concatenate(taps, axis=-1).reshape(N * H * W, 9 * 3)

    kern = functools.partial(_net_kernel, N=N, H=H, W=W)
    return pl.pallas_call(
        kern,
        out_shape=jax.ShapeDtypeStruct((N, 4), jnp.float32),
        in_specs=[pl.BlockSpec(memory_space=pltpu.MemorySpace.VMEM)] * 13,
        out_specs=pl.BlockSpec(memory_space=pltpu.MemorySpace.VMEM),
        scratch_shapes=[
            pltpu.VMEM((N * H, W, C1), jnp.float32),             # conv1 act
            pltpu.VMEM((N * H2, W, C1), jnp.float32),            # row-pooled 1
            pltpu.VMEM((N, H2 + 2, W2 + 2, C1), jnp.float32),    # padded conv2 in
            pltpu.VMEM((N * H2, W2, C2), jnp.float32),           # conv2 act
            pltpu.VMEM((N, H3, W2, C2), jnp.float32),            # row-pooled 2
        ],
    )(xcol, kp["w1"], kp["b1"], kp["w2"], kp["b2"],
      kp["wf1"], kp["bf1"], kp["wf2"], kp["bf2"],
      kp["wf3"], kp["bf3"], kp["wf4"], kp["bf4"])


# ----------------------------------------------------------------------------
# Parameter handling
# ----------------------------------------------------------------------------
def prepare_params(params, H, W):
    """One-time repack of PyTorch-layout weights into kernel layout."""
    H3, W3 = H // 4, W // 4
    # Conv weights OIHW -> HWIO -> (9*Cin, Cout) im2col layout.
    w1 = jnp.transpose(params["w_conv1"], (2, 3, 1, 0)).reshape(9 * 3, C1)
    w2 = jnp.transpose(params["w_conv2"], (2, 3, 1, 0)).reshape(9 * C1, C2)
    # fc1: PyTorch (out, in) with `in` indexed in torch-flatten (c, h, w) order.
    # Transpose and permute rows to the kernel's lane-dense (h, w, c) order.
    wf1 = (params["w_fc1"].T
           .reshape(C2, H3, W3, -1)
           .transpose(1, 2, 0, 3)
           .reshape(H3 * W3 * C2, -1))
    return {
        "w1": w1, "b1": params["b_conv1"][None, :],
        "w2": w2, "b2": params["b_conv2"][None, :],
        "wf1": wf1, "bf1": params["b_fc1"][None, :],
        "wf2": params["w_fc2"].T, "bf2": params["b_fc2"][None, :],
        "wf3": params["w_fc3"].T, "bf3": params["b_fc3"][None, :],
        "wf4": params["w_fc4"].T, "bf4": params["b_fc4"][None, :],
    }


def init_params(key, H, W):
    feat = C2 * (H // 4) * (W // 4)   # = 1024 for 16x16 (360000 for 300x300)

    def init(k, shape, fan_in):
        return jax.random.normal(k, shape, jnp.float32) / jnp.sqrt(float(fan_in))

    ks = jax.random.split(key, 12)
    return {
        # PyTorch conv weight layout: (Cout, Cin, kH, kW)
        "w_conv1": init(ks[0], (C1, 3, 3, 3), 3 * 9),
        "b_conv1": init(ks[1], (C1,), 3 * 9),
        "w_conv2": init(ks[2], (C2, C1, 3, 3), C1 * 9),
        "b_conv2": init(ks[3], (C2,), C1 * 9),
        # PyTorch linear weight layout: (out_features, in_features)
        "w_fc1": init(ks[4], (128, feat), feat),
        "b_fc1": init(ks[5], (128,), feat),
        "w_fc2": init(ks[6], (64, 128), 128),
        "b_fc2": init(ks[7], (64,), 128),
        "w_fc3": init(ks[8], (32, 64), 64),
        "b_fc3": init(ks[9], (32,), 64),
        "w_fc4": init(ks[10], (4, 32), 32),
        "b_fc4": init(ks[11], (4,), 32),
    }


if __name__ == "__main__":
    key = jax.random.PRNGKey(0)
    k_x, k_p = jax.random.split(key)

    N, C, H, W = 2, 3, 16, 16
    x = jax.random.normal(k_x, (N, C, H, W), jnp.float32)   # NCHW, like PyTorch
    params = init_params(k_p, H, W)
    kparams = prepare_params(params, H, W)                  # one-time repack

    out = net_forward(x, kparams)
    jax.block_until_ready(out)
    assert out.shape == (N, 4) and out.dtype == jnp.float32
    print("KERNEL_OK")
</pallas_src>

<mosaic_0001>
module attributes {stable_mosaic.version = 11 : i64} {
  func.func @_net_kernel(%arg0: memref<512x27xf32, #tpu.memory_space<vmem>>, %arg1: memref<27x32xf32, #tpu.memory_space<vmem>>, %arg2: memref<1x32xf32, #tpu.memory_space<vmem>>, %arg3: memref<288x64xf32, #tpu.memory_space<vmem>>, %arg4: memref<1x64xf32, #tpu.memory_space<vmem>>, %arg5: memref<1024x128xf32, #tpu.memory_space<vmem>>, %arg6: memref<1x128xf32, #tpu.memory_space<vmem>>, %arg7: memref<128x64xf32, #tpu.memory_space<vmem>>, %arg8: memref<1x64xf32, #tpu.memory_space<vmem>>, %arg9: memref<64x32xf32, #tpu.memory_space<vmem>>, %arg10: memref<1x32xf32, #tpu.memory_space<vmem>>, %arg11: memref<32x4xf32, #tpu.memory_space<vmem>>, %arg12: memref<1x4xf32, #tpu.memory_space<vmem>>, %arg13: memref<2x4xf32, #tpu.memory_space<vmem>>, %arg14: memref<32x16x32xf32, #tpu.memory_space<vmem>>, %arg15: memref<16x16x32xf32, #tpu.memory_space<vmem>>, %arg16: memref<2x10x10x32xf32, #tpu.memory_space<vmem>>, %arg17: memref<16x8x64xf32, #tpu.memory_space<vmem>>, %arg18: memref<2x4x8x64xf32, #tpu.memory_space<vmem>>) attributes {dimension_semantics = [], scalar_prefetch = 0 : i64, scratch_operands = 5 : i64, tpu.core_type = #tpu.core_type<tc>} {
    %c0 = arith.constant 0 : index
    %c0_0 = arith.constant 0 : index
    %0 = vector.load %arg0[%c0, %c0_0] : memref<512x27xf32, #tpu.memory_space<vmem>>, vector<512x27xf32>
    %c0_1 = arith.constant 0 : index
    %c0_2 = arith.constant 0 : index
    %1 = vector.load %arg1[%c0_1, %c0_2] : memref<27x32xf32, #tpu.memory_space<vmem>>, vector<27x32xf32>
    %cst = arith.constant dense<0.000000e+00> : vector<512x32xf32>
    %2 = tpu.matmul %0, %1, %cst {dimension_numbers = #tpu.dot_dimension_numbers<[1], [0], [0], [1], [0, 0, 1, 1], [], []>} : vector<512x27xf32>, vector<27x32xf32>, vector<512x32xf32> -> vector<512x32xf32>
    %c0_3 = arith.constant 0 : index
    %c0_4 = arith.constant 0 : index
    %3 = vector.load %arg2[%c0_3, %c0_4] : memref<1x32xf32, #tpu.memory_space<vmem>>, vector<1x32xf32>
    %4 = vector.broadcast %3 : vector<1x32xf32> to vector<512x32xf32>
    %5 = arith.addf %2, %4 : vector<512x32xf32>
    %cst_5 = arith.constant 0.000000e+00 : f32
    %6 = vector.broadcast %cst_5 : f32 to vector<512x32xf32>
    %7 = arith.maximumf %5, %6 : vector<512x32xf32>
    %8 = vector.shape_cast %7 : vector<512x32xf32> to vector<32x16x32xf32>
    %c0_6 = arith.constant 0 : index
    %c0_7 = arith.constant 0 : index
    %c0_8 = arith.constant 0 : index
    %9 = vector.load %arg14[%c0_6, %c0_7, %c0_8] : memref<32x16x32xf32, #tpu.memory_space<vmem>>, vector<32x16x32xf32>
    tpu.vector_store %arg14[%c0_6, %c0_7, %c0_8], %8 {strides = array<i32>} : memref<32x16x32xf32, #tpu.memory_space<vmem>>, vector<32x16x32xf32>,
    %c0_9 = arith.constant 0 : index
    %c0_10 = arith.constant 0 : index
    %c0_11 = arith.constant 0 : index
    %10 = tpu.strided_load %arg14[%c0_9, %c0_10, %c0_11] {strides = array<i32: 2, 1, 1>} : memref<32x16x32xf32, #tpu.memory_space<vmem>>, vector<16x16x32xf32>
    %c1 = arith.constant 1 : index
    %c0_12 = arith.constant 0 : index
    %c0_13 = arith.constant 0 : index
    %11 = tpu.strided_load %arg14[%c1, %c0_12, %c0_13] {strides = array<i32: 2, 1, 1>} : memref<32x16x32xf32, #tpu.memory_space<vmem>>, vector<16x16x32xf32>
    %12 = arith.maximumf %10, %11 : vector<16x16x32xf32>
    %c0_14 = arith.constant 0 : index
    %c0_15 = arith.constant 0 : index
    %c0_16 = arith.constant 0 : index
    %13 = vector.load %arg15[%c0_14, %c0_15, %c0_16] : memref<16x16x32xf32, #tpu.memory_space<vmem>>, vector<16x16x32xf32>
    tpu.vector_store %arg15[%c0_14, %c0_15, %c0_16], %12 {strides = array<i32>} : memref<16x16x32xf32, #tpu.memory_space<vmem>>, vector<16x16x32xf32>,
    %c0_17 = arith.constant 0 : index
    %c0_18 = arith.constant 0 : index
    %c0_19 = arith.constant 0 : index
    %14 = tpu.strided_load %arg15[%c0_17, %c0_18, %c0_19] {strides = array<i32: 1, 2, 1>} : memref<16x16x32xf32, #tpu.memory_space<vmem>>, vector<16x8x32xf32>
    %c0_20 = arith.constant 0 : index
    %c1_21 = arith.constant 1 : index
    %c0_22 = arith.constant 0 : index
    %15 = tpu.strided_load %arg15[%c0_20, %c1_21, %c0_22] {strides = array<i32: 1, 2, 1>} : memref<16x16x32xf32, #tpu.memory_space<vmem>>, vector<16x8x32xf32>
    %16 = arith.maximumf %14, %15 : vector<16x8x32xf32>
    %cst_23 = arith.constant 0.000000e+00 : f32
    %17 = vector.broadcast %cst_23 : f32 to vector<2x10x10x32xf32>
    %c0_24 = arith.constant 0 : index
    %c0_25 = arith.constant 0 : index
    %c0_26 = arith.constant 0 : index
    %c0_27 = arith.constant 0 : index
    %18 = vector.load %arg16[%c0_24, %c0_25, %c0_26, %c0_27] : memref<2x10x10x32xf32, #tpu.memory_space<vmem>>, vector<2x10x10x32xf32>
    tpu.vector_store %arg16[%c0_24, %c0_25, %c0_26, %c0_27], %17 {strides = array<i32>} : memref<2x10x10x32xf32, #tpu.memory_space<vmem>>, vector<2x10x10x32xf32>,
    %19 = vector.shape_cast %16 : vector<16x8x32xf32> to vector<2x8x8x32xf32>
    %c0_28 = arith.constant 0 : index
    %c1_29 = arith.constant 1 : index
    %c1_30 = arith.constant 1 : index
    %c0_31 = arith.constant 0 : index
    %20 = vector.load %arg16[%c0_28, %c1_29, %c1_30, %c0_31] : memref<2x10x10x32xf32, #tpu.memory_space<vmem>>, vector<2x8x8x32xf32>
    tpu.vector_store %arg16[%c0_28, %c1_29, %c1_30, %c0_31], %19 {strides = array<i32>} : memref<2x10x10x32xf32, #tpu.memory_space<vmem>>, vector<2x8x8x32xf32>,
    %c0_32 = arith.constant 0 : index
    %c0_33 = arith.constant 0 : index
    %c0_34 = arith.constant 0 : index
    %c0_35 = arith.constant 0 : index
    %21 = vector.load %arg16[%c0_32, %c0_33, %c0_34, %c0_35] : memref<2x10x10x32xf32, #tpu.memory_space<vmem>>, vector<2x8x8x32xf32>
    %c0_36 = arith.constant 0 : index
    %c0_37 = arith.constant 0 : index
    %c1_38 = arith.constant 1 : index
    %c0_39 = arith.constant 0 : index
    %22 = vector.load %arg16[%c0_36, %c0_37, %c1_38, %c0_39] : memref<2x10x10x32xf32, #tpu.memory_space<vmem>>, vector<2x8x8x32xf32>
    %c0_40 = arith.constant 0 : index
    %c0_41 = arith.constant 0 : index
    %c2 = arith.constant 2 : index
    %c0_42 = arith.constant 0 : index
    %23 = vector.load %arg16[%c0_40, %c0_41, %c2, %c0_42] : memref<2x10x10x32xf32, #tpu.memory_space<vmem>>, vector<2x8x8x32xf32>
    %c0_43 = arith.constant 0 : index
    %c1_44 = arith.constant 1 : index
    %c0_45 = arith.constant 0 : index
    %c0_46 = arith.constant 0 : index
    %24 = vector.load %arg16[%c0_43, %c1_44, %c0_45, %c0_46] : memref<2x10x10x32xf32, #tpu.memory_space<vmem>>, vector<2x8x8x32xf32>
    %c0_47 = arith.constant 0 : index
    %c1_48 = arith.constant 1 : index
    %c1_49 = arith.constant 1 : index
    %c0_50 = arith.constant 0 : index
    %25 = vector.load %arg16[%c0_47, %c1_48, %c1_49, %c0_50] : memref<2x10x10x32xf32, #tpu.memory_space<vmem>>, vector<2x8x8x32xf32>
    %c0_51 = arith.constant 0 : index
    %c1_52 = arith.constant 1 : index
    %c2_53 = arith.constant 2 : index
    %c0_54 = arith.constant 0 : index
    %26 = vector.load %arg16[%c0_51, %c1_52, %c2_53, %c0_54] : memref<2x10x10x32xf32, #tpu.memory_space<vmem>>, vector<2x8x8x32xf32>
    %c0_55 = arith.constant 0 : index
    %c2_56 = arith.constant 2 : index
    %c0_57 = arith.constant 0 : index
    %c0_58 = arith.constant 0 : index
    %27 = vector.load %arg16[%c0_55, %c2_56, %c0_57, %c0_58] : memref<2x10x10x32xf32, #tpu.memory_space<vmem>>, vector<2x8x8x32xf32>
    %c0_59 = arith.constant 0 : index
    %c2_60 = arith.constant 2 : index
    %c1_61 = arith.constant 1 : index
    %c0_62 = arith.constant 0 : index
    %28 = vector.load %arg16[%c0_59, %c2_60, %c1_61, %c0_62] : memref<2x10x10x32xf32, #tpu.memory_space<vmem>>, vector<2x8x8x32xf32>
    %c0_63 = arith.constant 0 : index
    %c2_64 = arith.constant 2 : index
    %c2_65 = arith.constant 2 : index
    %c0_66 = arith.constant 0 : index
    %29 = vector.load %arg16[%c0_63, %c2_64, %c2_65, %c0_66] : memref<2x10x10x32xf32, #tpu.memory_space<vmem>>, vector<2x8x8x32xf32>
    %30 = tpu.concatenate %21, %22, %23, %24, %25, %26, %27, %28, %29 in 3 : vector<2x8x8x32xf32>, vector<2x8x8x32xf32>, vector<2x8x8x32xf32>, vector<2x8x8x32xf32>, vector<2x8x8x32xf32>, vector<2x8x8x32xf32>, vector<2x8x8x32xf32>, vector<2x8x8x32xf32>, vector<2x8x8x32xf32> -> vector<2x8x8x288xf32>
    %31 = vector.shape_cast %30 : vector<2x8x8x288xf32> to vector<128x288xf32>
    %c0_67 = arith.constant 0 : index
    %c0_68 = arith.constant 0 : index
    %32 = vector.load %arg3[%c0_67, %c0_68] : memref<288x64xf32, #tpu.memory_space<vmem>>, vector<288x64xf32>
    %cst_69 = arith.constant dense<0.000000e+00> : vector<128x64xf32>
    %33 = tpu.matmul %31, %32, %cst_69 {dimension_numbers = #tpu.dot_dimension_numbers<[1], [0], [0], [1], [0, 0, 1, 1], [], []>} : vector<128x288xf32>, vector<288x64xf32>, vector<128x64xf32> -> vector<128x64xf32>
    %c0_70 = arith.constant 0 : index
    %c0_71 = arith.constant 0 : index
    %34 = vector.load %arg4[%c0_70, %c0_71] : memref<1x64xf32, #tpu.memory_space<vmem>>, vector<1x64xf32>
    %35 = vector.broadcast %34 : vector<1x64xf32> to vector<128x64xf32>
    %36 = arith.addf %33, %35 : vector<128x64xf32>
    %cst_72 = arith.constant 0.000000e+00 : f32
    %37 = vector.broadcast %cst_72 : f32 to vector<128x64xf32>
    %38 = arith.maximumf %36, %37 : vector<128x64xf32>
    %39 = vector.shape_cast %38 : vector<128x64xf32> to vector<16x8x64xf32>
    %c0_73 = arith.constant 0 : index
    %c0_74 = arith.constant 0 : index
    %c0_75 = arith.constant 0 : index
    %40 = vector.load %arg17[%c0_73, %c0_74, %c0_75] : memref<16x8x64xf32, #tpu.memory_space<vmem>>, vector<16x8x64xf32>
    tpu.vector_store %arg17[%c0_73, %c0_74, %c0_75], %39 {strides = array<i32>} : memref<16x8x64xf32, #tpu.memory_space<vmem>>, vector<16x8x64xf32>,
    %c0_76 = arith.constant 0 : index
    %c0_77 = arith.constant 0 : index
    %c0_78 = arith.constant 0 : index
    %41 = tpu.strided_load %arg17[%c0_76, %c0_77, %c0_78] {strides = array<i32: 2, 1, 1>} : memref<16x8x64xf32, #tpu.memory_space<vmem>>, vector<8x8x64xf32>
    %c1_79 = arith.constant 1 : index
    %c0_80 = arith.constant 0 : index
    %c0_81 = arith.constant 0 : index
    %42 = tpu.strided_load %arg17[%c1_79, %c0_80, %c0_81] {strides = array<i32: 2, 1, 1>} : memref<16x8x64xf32, #tpu.memory_space<vmem>>, vector<8x8x64xf32>
    %43 = arith.maximumf %41, %42 : vector<8x8x64xf32>
    %44 = vector.shape_cast %43 : vector<8x8x64xf32> to vector<2x4x8x64xf32>
    %c0_82 = arith.constant 0 : index
    %c0_83 = arith.constant 0 : index
    %c0_84 = arith.constant 0 : index
    %c0_85 = arith.constant 0 : index
    %45 = vector.load %arg18[%c0_82, %c0_83, %c0_84, %c0_85] : memref<2x4x8x64xf32, #tpu.memory_space<vmem>>, vector<2x4x8x64xf32>
    tpu.vector_store %arg18[%c0_82, %c0_83, %c0_84, %c0_85], %44 {strides = array<i32>} : memref<2x4x8x64xf32, #tpu.memory_space<vmem>>, vector<2x4x8x64xf32>,
    %c0_86 = arith.constant 0 : index
    %c0_87 = arith.constant 0 : index
    %c0_88 = arith.constant 0 : index
    %c0_89 = arith.constant 0 : index
    %46 = vector.load %arg18[%c0_86, %c0_87, %c0_88, %c0_89] : memref<2x4x8x64xf32, #tpu.memory_space<vmem>>, vector<2x1x1x64xf32>
    %47 = vector.shape_cast %46 : vector<2x1x1x64xf32> to vector<2x64xf32>
    %c0_90 = arith.constant 0 : index
    %c0_91 = arith.constant 0 : index
    %c1_92 = arith.constant 1 : index
    %c0_93 = arith.constant 0 : index
    %48 = vector.load %arg18[%c0_90, %c0_91, %c1_92, %c0_93] : memref<2x4x8x64xf32, #tpu.memory_space<vmem>>, vector<2x1x1x64xf32>
    %49 = vector.shape_cast %48 : vector<2x1x1x64xf32> to vector<2x64xf32>
    %50 = arith.maximumf %47, %49 : vector<2x64xf32>
    %c0_94 = arith.constant 0 : index
    %c0_95 = arith.constant 0 : index
    %c2_96 = arith.constant 2 : index
    %c0_97 = arith.constant 0 : index
    %51 = vector.load %arg18[%c0_94, %c0_95, %c2_96, %c0_97] : memref<2x4x8x64xf32, #tpu.memory_space<vmem>>, vector<2x1x1x64xf32>
    %52 = vector.shape_cast %51 : vector<2x1x1x64xf32> to vector<2x64xf32>
    %c0_98 = arith.constant 0 : index
    %c0_99 = arith.constant 0 : index
    %c3 = arith.constant 3 : index
    %c0_100 = arith.constant 0 : index
    %53 = vector.load %arg18[%c0_98, %c0_99, %c3, %c0_100] : memref<2x4x8x64xf32, #tpu.memory_space<vmem>>, vector<2x1x1x64xf32>
    %54 = vector.shape_cast %53 : vector<2x1x1x64xf32> to vector<2x64xf32>
    %55 = arith.maximumf %52, %54 : vector<2x64xf32>
    %c0_101 = arith.constant 0 : index
    %c0_102 = arith.constant 0 : index
    %c4 = arith.constant 4 : index
    %c0_103 = arith.constant 0 : index
    %56 = vector.load %arg18[%c0_101, %c0_102, %c4, %c0_103] : memref<2x4x8x64xf32, #tpu.memory_space<vmem>>, vector<2x1x1x64xf32>
    %57 = vector.shape_cast %56 : vector<2x1x1x64xf32> to vector<2x64xf32>
    %c0_104 = arith.constant 0 : index
    %c0_105 = arith.constant 0 : index
    %c5 = arith.constant 5 : index
    %c0_106 = arith.constant 0 : index
    %58 = vector.load %arg18[%c0_104, %c0_105, %c5, %c0_106] : memref<2x4x8x64xf32, #tpu.memory_space<vmem>>, vector<2x1x1x64xf32>
    %59 = vector.shape_cast %58 : vector<2x1x1x64xf32> to vector<2x64xf32>
    %60 = arith.maximumf %57, %59 : vector<2x64xf32>
    %c0_107 = arith.constant 0 : index
    %c0_108 = arith.constant 0 : index
    %c6 = arith.constant 6 : index
    %c0_109 = arith.constant 0 : index
    %61 = vector.load %arg18[%c0_107, %c0_108, %c6, %c0_109] : memref<2x4x8x64xf32, #tpu.memory_space<vmem>>, vector<2x1x1x64xf32>
    %62 = vector.shape_cast %61 : vector<2x1x1x64xf32> to vector<2x64xf32>
    %c0_110 = arith.constant 0 : index
    %c0_111 = arith.constant 0 : index
    %c7 = arith.constant 7 : index
    %c0_112 = arith.constant 0 : index
    %63 = vector.load %arg18[%c0_110, %c0_111, %c7, %c0_112] : memref<2x4x8x64xf32, #tpu.memory_space<vmem>>, vector<2x1x1x64xf32>
    %64 = vector.shape_cast %63 : vector<2x1x1x64xf32> to vector<2x64xf32>
    %65 = arith.maximumf %62, %64 : vector<2x64xf32>
    %c0_113 = arith.constant 0 : index
    %c1_114 = arith.constant 1 : index
    %c0_115 = arith.constant 0 : index
    %c0_116 = arith.constant 0 : index
    %66 = vector.load %arg18[%c0_113, %c1_114, %c0_115, %c0_116] : memref<2x4x8x64xf32, #tpu.memory_space<vmem>>, vector<2x1x1x64xf32>
    %67 = vector.shape_cast %66 : vector<2x1x1x64xf32> to vector<2x64xf32>
    %c0_117 = arith.constant 0 : index
    %c1_118 = arith.constant 1 : index
    %c1_119 = arith.constant 1 : index
    %c0_120 = arith.constant 0 : index
    %68 = vector.load %arg18[%c0_117, %c1_118, %c1_119, %c0_120] : memref<2x4x8x64xf32, #tpu.memory_space<vmem>>, vector<2x1x1x64xf32>
    %69 = vector.shape_cast %68 : vector<2x1x1x64xf32> to vector<2x64xf32>
    %70 = arith.maximumf %67, %69 : vector<2x64xf32>
    %c0_121 = arith.constant 0 : index
    %c1_122 = arith.constant 1 : index
    %c2_123 = arith.constant 2 : index
    %c0_124 = arith.constant 0 : index
    %71 = vector.load %arg18[%c0_121, %c1_122, %c2_123, %c0_124] : memref<2x4x8x64xf32, #tpu.memory_space<vmem>>, vector<2x1x1x64xf32>
    %72 = vector.shape_cast %71 : vector<2x1x1x64xf32> to vector<2x64xf32>
    %c0_125 = arith.constant 0 : index
    %c1_126 = arith.constant 1 : index
    %c3_127 = arith.constant 3 : index
    %c0_128 = arith.constant 0 : index
    %73 = vector.load %arg18[%c0_125, %c1_126, %c3_127, %c0_128] : memref<2x4x8x64xf32, #tpu.memory_space<vmem>>, vector<2x1x1x64xf32>
    %74 = vector.shape_cast %73 : vector<2x1x1x64xf32> to vector<2x64xf32>
    %75 = arith.maximumf %72, %74 : vector<2x64xf32>
    %c0_129 = arith.constant 0 : index
    %c1_130 = arith.constant 1 : index
    %c4_131 = arith.constant 4 : index
    %c0_132 = arith.constant 0 : index
    %76 = vector.load %arg18[%c0_129, %c1_130, %c4_131, %c0_132] : memref<2x4x8x64xf32, #tpu.memory_space<vmem>>, vector<2x1x1x64xf32>
    %77 = vector.shape_cast %76 : vector<2x1x1x64xf32> to vector<2x64xf32>
    %c0_133 = arith.constant 0 : index
    %c1_134 = arith.constant 1 : index
    %c5_135 = arith.constant 5 : index
    %c0_136 = arith.constant 0 : index
    %78 = vector.load %arg18[%c0_133, %c1_134, %c5_135, %c0_136] : memref<2x4x8x64xf32, #tpu.memory_space<vmem>>, vector<2x1x1x64xf32>
    %79 = vector.shape_cast %78 : vector<2x1x1x64xf32> to vector<2x64xf32>
    %80 = arith.maximumf %77, %79 : vector<2x64xf32>
    %c0_137 = arith.constant 0 : index
    %c1_138 = arith.constant 1 : index
    %c6_139 = arith.constant 6 : index
    %c0_140 = arith.constant 0 : index
    %81 = vector.load %arg18[%c0_137, %c1_138, %c6_139, %c0_140] : memref<2x4x8x64xf32, #tpu.memory_space<vmem>>, vector<2x1x1x64xf32>
    %82 = vector.shape_cast %81 : vector<2x1x1x64xf32> to vector<2x64xf32>
    %c0_141 = arith.constant 0 : index
    %c1_142 = arith.constant 1 : index
    %c7_143 = arith.constant 7 : index
    %c0_144 = arith.constant 0 : index
    %83 = vector.load %arg18[%c0_141, %c1_142, %c7_143, %c0_144] : memref<2x4x8x64xf32, #tpu.memory_space<vmem>>, vector<2x1x1x64xf32>
    %84 = vector.shape_cast %83 : vector<2x1x1x64xf32> to vector<2x64xf32>
    %85 = arith.maximumf %82, %84 : vector<2x64xf32>
    %c0_145 = arith.constant 0 : index
    %c2_146 = arith.constant 2 : index
    %c0_147 = arith.constant 0 : index
    %c0_148 = arith.constant 0 : index
    %86 = vector.load %arg18[%c0_145, %c2_146, %c0_147, %c0_148] : memref<2x4x8x64xf32, #tpu.memory_space<vmem>>, vector<2x1x1x64xf32>
    %87 = vector.shape_cast %86 : vector<2x1x1x64xf32> to vector<2x64xf32>
    %c0_149 = arith.constant 0 : index
    %c2_150 = arith.constant 2 : index
    %c1_151 = arith.constant 1 : index
    %c0_152 = arith.constant 0 : index
    %88 = vector.load %arg18[%c0_149, %c2_150, %c1_151, %c0_152] : memref<2x4x8x64xf32, #tpu.memory_space<vmem>>, vector<2x1x1x64xf32>
    %89 = vector.shape_cast %88 : vector<2x1x1x64xf32> to vector<2x64xf32>
    %90 = arith.maximumf %87, %89 : vector<2x64xf32>
    %c0_153 = arith.constant 0 : index
    %c2_154 = arith.constant 2 : index
    %c2_155 = arith.constant 2 : index
    %c0_156 = arith.constant 0 : index
    %91 = vector.load %arg18[%c0_153, %c2_154, %c2_155, %c0_156] : memref<2x4x8x64xf32, #tpu.memory_space<vmem>>, vector<2x1x1x64xf32>
    %92 = vector.shape_cast %91 : vector<2x1x1x64xf32> to vector<2x64xf32>
    %c0_157 = arith.constant 0 : index
    %c2_158 = arith.constant 2 : index
    %c3_159 = arith.constant 3 : index
    %c0_160 = arith.constant 0 : index
    %93 = vector.load %arg18[%c0_157, %c2_158, %c3_159, %c0_160] : memref<2x4x8x64xf32, #tpu.memory_space<vmem>>, vector<2x1x1x64xf32>
    %94 = vector.shape_cast %93 : vector<2x1x1x64xf32> to vector<2x64xf32>
    %95 = arith.maximumf %92, %94 : vector<2x64xf32>
    %c0_161 = arith.constant 0 : index
    %c2_162 = arith.constant 2 : index
    %c4_163 = arith.constant 4 : index
    %c0_164 = arith.constant 0 : index
    %96 = vector.load %arg18[%c0_161, %c2_162, %c4_163, %c0_164] : memref<2x4x8x64xf32, #tpu.memory_space<vmem>>, vector<2x1x1x64xf32>
    %97 = vector.shape_cast %96 : vector<2x1x1x64xf32> to vector<2x64xf32>
    %c0_165 = arith.constant 0 : index
    %c2_166 = arith.constant 2 : index
    %c5_167 = arith.constant 5 : index
    %c0_168 = arith.constant 0 : index
    %98 = vector.load %arg18[%c0_165, %c2_166, %c5_167, %c0_168] : memref<2x4x8x64xf32, #tpu.memory_space<vmem>>, vector<2x1x1x64xf32>
    %99 = vector.shape_cast %98 : vector<2x1x1x64xf32> to vector<2x64xf32>
    %100 = arith.maximumf %97, %99 : vector<2x64xf32>
    %c0_169 = arith.constant 0 : index
    %c2_170 = arith.constant 2 : index
    %c6_171 = arith.constant 6 : index
    %c0_172 = arith.constant 0 : index
    %101 = vector.load %arg18[%c0_169, %c2_170, %c6_171, %c0_172] : memref<2x4x8x64xf32, #tpu.memory_space<vmem>>, vector<2x1x1x64xf32>
    %102 = vector.shape_cast %101 : vector<2x1x1x64xf32> to vector<2x64xf32>
    %c0_173 = arith.constant 0 : index
    %c2_174 = arith.constant 2 : index
    %c7_175 = arith.constant 7 : index
    %c0_176 = arith.constant 0 : index
    %103 = vector.load %arg18[%c0_173, %c2_174, %c7_175, %c0_176] : memref<2x4x8x64xf32, #tpu.memory_space<vmem>>, vector<2x1x1x64xf32>
    %104 = vector.shape_cast %103 : vector<2x1x1x64xf32> to vector<2x64xf32>
    %105 = arith.maximumf %102, %104 : vector<2x64xf32>
    %c0_177 = arith.constant 0 : index
    %c3_178 = arith.constant 3 : index
    %c0_179 = arith.constant 0 : index
    %c0_180 = arith.constant 0 : index
    %106 = vector.load %arg18[%c0_177, %c3_178, %c0_179, %c0_180] : memref<2x4x8x64xf32, #tpu.memory_space<vmem>>, vector<2x1x1x64xf32>
    %107 = vector.shape_cast %106 : vector<2x1x1x64xf32> to vector<2x64xf32>
    %c0_181 = arith.constant 0 : index
    %c3_182 = arith.constant 3 : index
    %c1_183 = arith.constant 1 : index
    %c0_184 = arith.constant 0 : index
    %108 = vector.load %arg18[%c0_181, %c3_182, %c1_183, %c0_184] : memref<2x4x8x64xf32, #tpu.memory_space<vmem>>, vector<2x1x1x64xf32>
    %109 = vector.shape_cast %108 : vector<2x1x1x64xf32> to vector<2x64xf32>
    %110 = arith.maximumf %107, %109 : vector<2x64xf32>
    %c0_185 = arith.constant 0 : index
    %c3_186 = arith.constant 3 : index
    %c2_187 = arith.constant 2 : index
    %c0_188 = arith.constant 0 : index
    %111 = vector.load %arg18[%c0_185, %c3_186, %c2_187, %c0_188] : memref<2x4x8x64xf32, #tpu.memory_space<vmem>>, vector<2x1x1x64xf32>
    %112 = vector.shape_cast %111 : vector<2x1x1x64xf32> to vector<2x64xf32>
    %c0_189 = arith.constant 0 : index
    %c3_190 = arith.constant 3 : index
    %c3_191 = arith.constant 3 : index
    %c0_192 = arith.constant 0 : index
    %113 = vector.load %arg18[%c0_189, %c3_190, %c3_191, %c0_192] : memref<2x4x8x64xf32, #tpu.memory_space<vmem>>, vector<2x1x1x64xf32>
    %114 = vector.shape_cast %113 : vector<2x1x1x64xf32> to vector<2x64xf32>
    %115 = arith.maximumf %112, %114 : vector<2x64xf32>
    %c0_193 = arith.constant 0 : index
    %c3_194 = arith.constant 3 : index
    %c4_195 = arith.constant 4 : index
    %c0_196 = arith.constant 0 : index
    %116 = vector.load %arg18[%c0_193, %c3_194, %c4_195, %c0_196] : memref<2x4x8x64xf32, #tpu.memory_space<vmem>>, vector<2x1x1x64xf32>
    %117 = vector.shape_cast %116 : vector<2x1x1x64xf32> to vector<2x64xf32>
    %c0_197 = arith.constant 0 : index
    %c3_198 = arith.constant 3 : index
    %c5_199 = arith.constant 5 : index
    %c0_200 = arith.constant 0 : index
    %118 = vector.load %arg18[%c0_197, %c3_198, %c5_199, %c0_200] : memref<2x4x8x64xf32, #tpu.memory_space<vmem>>, vector<2x1x1x64xf32>
    %119 = vector.shape_cast %118 : vector<2x1x1x64xf32> to vector<2x64xf32>
    %120 = arith.maximumf %117, %119 : vector<2x64xf32>
    %c0_201 = arith.constant 0 : index
    %c3_202 = arith.constant 3 : index
    %c6_203 = arith.constant 6 : index
    %c0_204 = arith.constant 0 : index
    %121 = vector.load %arg18[%c0_201, %c3_202, %c6_203, %c0_204] : memref<2x4x8x64xf32, #tpu.memory_space<vmem>>, vector<2x1x1x64xf32>
    %122 = vector.shape_cast %121 : vector<2x1x1x64xf32> to vector<2x64xf32>
    %c0_205 = arith.constant 0 : index
    %c3_206 = arith.constant 3 : index
    %c7_207 = arith.constant 7 : index
    %c0_208 = arith.constant 0 : index
    %123 = vector.load %arg18[%c0_205, %c3_206, %c7_207, %c0_208] : memref<2x4x8x64xf32, #tpu.memory_space<vmem>>, vector<2x1x1x64xf32>
    %124 = vector.shape_cast %123 : vector<2x1x1x64xf32> to vector<2x64xf32>
    %125 = arith.maximumf %122, %124 : vector<2x64xf32>
    %126 = tpu.concatenate %50, %55, %60, %65, %70, %75, %80, %85, %90, %95, %100, %105, %110, %115, %120, %125 in 1 : vector<2x64xf32>, vector<2x64xf32>, vector<2x64xf32>, vector<2x64xf32>, vector<2x64xf32>, vector<2x64xf32>, vector<2x64xf32>, vector<2x64xf32>, vector<2x64xf32>, vector<2x64xf32>, vector<2x64xf32>, vector<2x64xf32>, vector<2x64xf32>, vector<2x64xf32>, vector<2x64xf32>, vector<2x64xf32> -> vector<2x1024xf32>
    %c0_209 = arith.constant 0 : index
    %c0_210 = arith.constant 0 : index
    %127 = vector.load %arg5[%c0_209, %c0_210] : memref<1024x128xf32, #tpu.memory_space<vmem>>, vector<1024x128xf32>
    %cst_211 = arith.constant dense<0.000000e+00> : vector<2x128xf32>
    %128 = tpu.matmul %126, %127, %cst_211 {dimension_numbers = #tpu.dot_dimension_numbers<[1], [0], [0], [1], [0, 0, 1, 1], [], []>} : vector<2x1024xf32>, vector<1024x128xf32>, vector<2x128xf32> -> vector<2x128xf32>
    %c0_212 = arith.constant 0 : index
    %c0_213 = arith.constant 0 : index
    %129 = vector.load %arg6[%c0_212, %c0_213] : memref<1x128xf32, #tpu.memory_space<vmem>>, vector<1x128xf32>
    %130 = vector.broadcast %129 : vector<1x128xf32> to vector<2x128xf32>
    %131 = arith.addf %128, %130 : vector<2x128xf32>
    %cst_214 = arith.constant 0.000000e+00 : f32
    %132 = vector.broadcast %cst_214 : f32 to vector<2x128xf32>
    %133 = arith.maximumf %131, %132 : vector<2x128xf32>
    %c0_215 = arith.constant 0 : index
    %c0_216 = arith.constant 0 : index
    %134 = vector.load %arg7[%c0_215, %c0_216] : memref<128x64xf32, #tpu.memory_space<vmem>>, vector<128x64xf32>
    %cst_217 = arith.constant dense<0.000000e+00> : vector<2x64xf32>
    %135 = tpu.matmul %133, %134, %cst_217 {dimension_numbers = #tpu.dot_dimension_numbers<[1], [0], [0], [1], [0, 0, 1, 1], [], []>} : vector<2x128xf32>, vector<128x64xf32>, vector<2x64xf32> -> vector<2x64xf32>
    %c0_218 = arith.constant 0 : index
    %c0_219 = arith.constant 0 : index
    %136 = vector.load %arg8[%c0_218, %c0_219] : memref<1x64xf32, #tpu.memory_space<vmem>>, vector<1x64xf32>
    %137 = vector.broadcast %136 : vector<1x64xf32> to vector<2x64xf32>
    %138 = arith.addf %135, %137 : vector<2x64xf32>
    %cst_220 = arith.constant 0.000000e+00 : f32
    %139 = vector.broadcast %cst_220 : f32 to vector<2x64xf32>
    %140 = arith.maximumf %138, %139 : vector<2x64xf32>
    %c0_221 = arith.constant 0 : index
    %c0_222 = arith.constant 0 : index
    %141 = vector.load %arg9[%c0_221, %c0_222] : memref<64x32xf32, #tpu.memory_space<vmem>>, vector<64x32xf32>
    %cst_223 = arith.constant dense<0.000000e+00> : vector<2x32xf32>
    %142 = tpu.matmul %140, %141, %cst_223 {dimension_numbers = #tpu.dot_dimension_numbers<[1], [0], [0], [1], [0, 0, 1, 1], [], []>} : vector<2x64xf32>, vector<64x32xf32>, vector<2x32xf32> -> vector<2x32xf32>
    %c0_224 = arith.constant 0 : index
    %c0_225 = arith.constant 0 : index
    %143 = vector.load %arg10[%c0_224, %c0_225] : memref<1x32xf32, #tpu.memory_space<vmem>>, vector<1x32xf32>
    %144 = vector.broadcast %143 : vector<1x32xf32> to vector<2x32xf32>
    %145 = arith.addf %142, %144 : vector<2x32xf32>
    %cst_226 = arith.constant 0.000000e+00 : f32
    %146 = vector.broadcast %cst_226 : f32 to vector<2x32xf32>
    %147 = arith.maximumf %145, %146 : vector<2x32xf32>
    %c0_227 = arith.constant 0 : index
    %c0_228 = arith.constant 0 : index
    %148 = vector.load %arg11[%c0_227, %c0_228] : memref<32x4xf32, #tpu.memory_space<vmem>>, vector<32x4xf32>
    %cst_229 = arith.constant dense<0.000000e+00> : vector<2x4xf32>
    %149 = tpu.matmul %147, %148, %cst_229 {dimension_numbers = #tpu.dot_dimension_numbers<[1], [0], [0], [1], [0, 0, 1, 1], [], []>} : vector<2x32xf32>, vector<32x4xf32>, vector<2x4xf32> -> vector<2x4xf32>
    %c0_230 = arith.constant 0 : index
    %c0_231 = arith.constant 0 : index
    %150 = vector.load %arg12[%c0_230, %c0_231] : memref<1x4xf32, #tpu.memory_space<vmem>>, vector<1x4xf32>
    %151 = vector.broadcast %150 : vector<1x4xf32> to vector<2x4xf32>
    %152 = arith.addf %149, %151 : vector<2x4xf32>
    %c0_232 = arith.constant 0 : index
    %c0_233 = arith.constant 0 : index
    %153 = vector.load %arg13[%c0_232, %c0_233] : memref<2x4xf32, #tpu.memory_space<vmem>>, vector<2x4xf32>
    tpu.vector_store %arg13[%c0_232, %c0_233], %152 {strides = array<i32>} : memref<2x4xf32, #tpu.memory_space<vmem>>, vector<2x4xf32>,
    return
  }
}

</mosaic_0001>

<llo_original>
// kernel: net_forward.1
$region0: #{net_forward.1}
  #allocation0 [shape = 'u32[]', space=smem, size = 0x4, offset = 0x4, fixed_abs, tag = 'smem constant byte address 0x4 - core index']
  #allocation1 [shape = 'u32[72,128]{1,0:T(1,128)}', space=vmem, size = 0x9000, scoped, tag = 'internal scratch']
  #allocation2 [shape = 'f32[32,16,32]{2,1,0:T(8,128)}', space=vmem, size = 0x40000, scoped, tag = 'scratch operand']
  #allocation3 [shape = 'f32[16,16,32]{2,1,0:T(8,128)}', space=vmem, size = 0x20000, scoped, tag = 'scratch operand']
  #allocation4 [shape = 'f32[2,10,10,32]{3,2,1,0:T(8,128)}', space=vmem, size = 0x28000, scoped, tag = 'scratch operand']
  #allocation5 [shape = 'f32[16,8,64]{2,1,0:T(8,128)}', space=vmem, size = 0x10000, scoped, tag = 'scratch operand']
  #allocation6 [shape = 'f32[2,4,8,64]{3,2,1,0:T(8,128)}', space=vmem, size = 0x8000, scoped, tag = 'scratch operand']
  %s0 = inlined_call_operand.vmem [shape: f32[512,27], index: 0, kind: input, shape index: {}]
  %s1 = inlined_call_operand.vmem [shape: f32[27,32], index: 1, kind: input, shape index: {}]
  %s2 = inlined_call_operand.vmem [shape: f32[1,32], index: 2, kind: input, shape index: {}]
  %s3 = inlined_call_operand.vmem [shape: f32[288,64], index: 3, kind: input, shape index: {}]
  %s4 = inlined_call_operand.vmem [shape: f32[1,64], index: 4, kind: input, shape index: {}]
  %s5 = inlined_call_operand.vmem [shape: f32[1024,128], index: 5, kind: input, shape index: {}]
  %s6 = inlined_call_operand.vmem [shape: f32[1,128], index: 6, kind: input, shape index: {}]
  %s7 = inlined_call_operand.vmem [shape: f32[128,64], index: 7, kind: input, shape index: {}]
  %s8 = inlined_call_operand.vmem [shape: f32[1,64], index: 8, kind: input, shape index: {}]
  %s9 = inlined_call_operand.vmem [shape: f32[64,32], index: 9, kind: input, shape index: {}]
  %s10 = inlined_call_operand.vmem [shape: f32[1,32], index: 10, kind: input, shape index: {}]
  %s11 = inlined_call_operand.vmem [shape: f32[32,4], index: 11, kind: input, shape index: {}]
  %s12 = inlined_call_operand.vmem [shape: f32[1,4], index: 12, kind: input, shape index: {}]
  %s13 = inlined_call_operand.hbm [shape: f32[2,4], index: 13, kind: output, shape index: {}]
  %s14 = sld [smem:[#allocation0]]
  $region62: #{net_forward.1} parent=0
    _
  %s16 = ssub.s32 1, %s14
  %s17 = scalar_select 0, %s16, %s14
  $region1: #{net_forward.1} parent=0
    #allocation7 [shape = 'u8[1024]{0}', space=vmem, size = 0x400, scoped, tag = 'output window, operand 0, single buffered']
    #allocation8 [shape = 's32[1]{0}', space=sflag, size = 0x4, scoped, tag = 'scoped memory for net_forward.1']
    %18 = vsyncpa [#allocation8], 0
    // Predicated region
    $region2: #{net_forward.1} parent=1 // pred_check
      _
    $region3: #{net_forward.1} parent=1 // pred_check_branch
      %20 = sbr.rel (0) target = $region5
    $region4: #{net_forward.1} parent=1 // pred_region
      _
    $region5: #{net_forward.1} parent=1 // pred_fallthru
      _
    // Predicated region
    $region6: #{net_forward.1} parent=1 // pred_check
      _
    $region7: #{net_forward.1} parent=1 // pred_check_branch
      %22 = sbr.rel (0) target = $region9
    $region8: #{net_forward.1} parent=1 // pred_region
      _
    $region9: #{net_forward.1} parent=1 // pred_fallthru
      _
    // Predicated region
    $region10: #{net_forward.1} parent=1 // pred_check
      _
    $region11: #{net_forward.1} parent=1 // pred_check_branch
      %24 = sbr.rel (0) target = $region13
    $region12: #{net_forward.1} parent=1 // pred_region
      _
    $region13: #{net_forward.1} parent=1 // pred_fallthru
      _
    // Predicated region
    $region14: #{net_forward.1} parent=1 // pred_check
      _
    $region15: #{net_forward.1} parent=1 // pred_check_branch
      %26 = sbr.rel (0) target = $region17
    $region16: #{net_forward.1} parent=1 // pred_region
      _
    $region17: #{net_forward.1} parent=1 // pred_fallthru
      _
    // Predicated region
    $region18: #{net_forward.1} parent=1 // pred_check
      _
    $region19: #{net_forward.1} parent=1 // pred_check_branch
      %28 = sbr.rel (0) target = $region21
    $region20: #{net_forward.1} parent=1 // pred_region
      _
    $region21: #{net_forward.1} parent=1 // pred_fallthru
      _
    // Predicated region
    $region22: #{net_forward.1} parent=1 // pred_check
      _
    $region23: #{net_forward.1} parent=1 // pred_check_branch
      %30 = sbr.rel (0) target = $region25
    $region24: #{net_forward.1} parent=1 // pred_region
      _
    $region25: #{net_forward.1} parent=1 // pred_fallthru
      _
    // Predicated region
    $region26: #{net_forward.1} parent=1 // pred_check
      _
    $region27: #{net_forward.1} parent=1 // pred_check_branch
      %32 = sbr.rel (0) target = $region29
    $region28: #{net_forward.1} parent=1 // pred_region
      _
    $region29: #{net_forward.1} parent=1 // pred_fallthru
      _
    // Predicated region
    $region30: #{net_forward.1} parent=1 // pred_check
      _
    $region31: #{net_forward.1} parent=1 // pred_check_branch
      %34 = sbr.rel (0) target = $region33
    $region32: #{net_forward.1} parent=1 // pred_region
      _
    $region33: #{net_forward.1} parent=1 // pred_fallthru
      _
    // Predicated region
    $region34: #{net_forward.1} parent=1 // pred_check
      _
    $region35: #{net_forward.1} parent=1 // pred_check_branch
      %36 = sbr.rel (0) target = $region37
    $region36: #{net_forward.1} parent=1 // pred_region
      _
    $region37: #{net_forward.1} parent=1 // pred_fallthru
      _
    // Predicated region
    $region38: #{net_forward.1} parent=1 // pred_check
      _
    $region39: #{net_forward.1} parent=1 // pred_check_branch
      %38 = sbr.rel (0) target = $region41
    $region40: #{net_forward.1} parent=1 // pred_region
      _
    $region41: #{net_forward.1} parent=1 // pred_fallthru
      _
    // Predicated region
    $region42: #{net_forward.1} parent=1 // pred_check
      _
    $region43: #{net_forward.1} parent=1 // pred_check_branch
      %40 = sbr.rel (0) target = $region45
    $region44: #{net_forward.1} parent=1 // pred_region
      _
    $region45: #{net_forward.1} parent=1 // pred_fallthru
      _
    // Predicated region
    $region46: #{net_forward.1} parent=1 // pred_check
      _
    $region47: #{net_forward.1} parent=1 // pred_check_branch
      %42 = sbr.rel (0) target = $region49
    $region48: #{net_forward.1} parent=1 // pred_region
      _
    $region49: #{net_forward.1} parent=1 // pred_fallthru
      _
    // Predicated region
    $region50: #{net_forward.1} parent=1 // pred_check
      _
    $region51: #{net_forward.1} parent=1 // pred_check_branch
      %44 = sbr.rel (0) target = $region53
    $region52: #{net_forward.1} parent=1 // pred_region
      _
    $region53: #{net_forward.1} parent=1 // pred_fallthru
      _
    %v45 = vld [vmem:[%s0] sm:$0xff]
    %v46 = vld [vmem:[%s0 + $0x8] sm:$0xff]
    %v47 = vld [vmem:[%s0 + $0x10] sm:$0xff]
    %v48 = vld [vmem:[%s0 + $0x18] sm:$0xff]
    %v49 = vld [vmem:[%s0 + $0x20] sm:$0xff]
    %v50 = vld [vmem:[%s0 + $0x28] sm:$0xff]
    %v51 = vld [vmem:[%s0 + $0x30] sm:$0xff]
    %v52 = vld [vmem:[%s0 + $0x38] sm:$0xff]
    %v53 = vld [vmem:[%s0 + $0x40] sm:$0xff]
    %v54 = vld [vmem:[%s0 + $0x48] sm:$0xff]
    %v55 = vld [vmem:[%s0 + $0x50] sm:$0xff]
    %v56 = vld [vmem:[%s0 + $0x58] sm:$0xff]
    %v57 = vld [vmem:[%s0 + $0x60] sm:$0xff]
    %v58 = vld [vmem:[%s0 + $0x68] sm:$0xff]
    %v59 = vld [vmem:[%s0 + $0x70] sm:$0xff]
    %v60 = vld [vmem:[%s0 + $0x78] sm:$0xff]
    %v61 = vld [vmem:[%s0 + $0x80] sm:$0xff]
    %v62 = vld [vmem:[%s0 + $0x88] sm:$0xff]
    %v63 = vld [vmem:[%s0 + $0x90] sm:$0xff]
    %v64 = vld [vmem:[%s0 + $0x98] sm:$0xff]
    %v65 = vld [vmem:[%s0 + $0xa0] sm:$0xff]
    %v66 = vld [vmem:[%s0 + $0xa8] sm:$0xff]
    %v67 = vld [vmem:[%s0 + $0xb0] sm:$0xff]
    %v68 = vld [vmem:[%s0 + $0xb8] sm:$0xff]
    %v69 = vld [vmem:[%s0 + $0xc0] sm:$0xff]
    %v70 = vld [vmem:[%s0 + $0xc8] sm:$0xff]
    %v71 = vld [vmem:[%s0 + $0xd0] sm:$0xff]
    %v72 = vld [vmem:[%s0 + $0xd8] sm:$0xff]
    %v73 = vld [vmem:[%s0 + $0xe0] sm:$0xff]
    %v74 = vld [vmem:[%s0 + $0xe8] sm:$0xff]
    %v75 = vld [vmem:[%s0 + $0xf0] sm:$0xff]
    %v76 = vld [vmem:[%s0 + $0xf8] sm:$0xff]
    %v77 = vld [vmem:[%s0 + $0x100] sm:$0xff]
    %v78 = vld [vmem:[%s0 + $0x108] sm:$0xff]
    %v79 = vld [vmem:[%s0 + $0x110] sm:$0xff]
    %v80 = vld [vmem:[%s0 + $0x118] sm:$0xff]
    %v81 = vld [vmem:[%s0 + $0x120] sm:$0xff]
    %v82 = vld [vmem:[%s0 + $0x128] sm:$0xff]
    %v83 = vld [vmem:[%s0 + $0x130] sm:$0xff]
    %v84 = vld [vmem:[%s0 + $0x138] sm:$0xff]
    %v85 = vld [vmem:[%s0 + $0x140] sm:$0xff]
    %v86 = vld [vmem:[%s0 + $0x148] sm:$0xff]
    %v87 = vld [vmem:[%s0 + $0x150] sm:$0xff]
    %v88 = vld [vmem:[%s0 + $0x158] sm:$0xff]
    %v89 = vld [vmem:[%s0 + $0x160] sm:$0xff]
    %v90 = vld [vmem:[%s0 + $0x168] sm:$0xff]
    %v91 = vld [vmem:[%s0 + $0x170] sm:$0xff]
    %v92 = vld [vmem:[%s0 + $0x178] sm:$0xff]
    %v93 = vld [vmem:[%s0 + $0x180] sm:$0xff]
    %v94 = vld [vmem:[%s0 + $0x188] sm:$0xff]
    %v95 = vld [vmem:[%s0 + $0x190] sm:$0xff]
    %v96 = vld [vmem:[%s0 + $0x198] sm:$0xff]
    %v97 = vld [vmem:[%s0 + $0x1a0] sm:$0xff]
    %v98 = vld [vmem:[%s0 + $0x1a8] sm:$0xff]
    %v99 = vld [vmem:[%s0 + $0x1b0] sm:$0xff]
    %v100 = vld [vmem:[%s0 + $0x1b8] sm:$0xff]
    %v101 = vld [vmem:[%s0 + $0x1c0] sm:$0xff]
    %v102 = vld [vmem:[%s0 + $0x1c8] sm:$0xff]
    %v103 = vld [vmem:[%s0 + $0x1d0] sm:$0xff]
    %v104 = vld [vmem:[%s0 + $0x1d8] sm:$0xff]
    %v105 = vld [vmem:[%s0 + $0x1e0] sm:$0xff]
    %v106 = vld [vmem:[%s0 + $0x1e8] sm:$0xff]
    %v107 = vld [vmem:[%s0 + $0x1f0] sm:$0xff]
    %v108 = vld [vmem:[%s0 + $0x1f8] sm:$0xff]
    %v109 = vld [vmem:[%s1] sm:$0xff]
    %v110 = vld [vmem:[%s1 + $0x8] sm:$0xff]
    %v111 = vld [vmem:[%s1 + $0x10] sm:$0xff]
    %v112 = vld [vmem:[%s1 + $0x18] sm:$0x7]
    %v113 = vld [vmem:[%s2] sm:$0x1]
    %v115 = vperm.slane %v113, 0
    %vm117 = vcmask 220160
    %v119 = vsel %vm117, %v45, 0
    %v122 = vsel %vm117, %v46, 0
    %v125 = vsel %vm117, %v47, 0
    %v128 = vsel %vm117, %v48, 0
    %v131 = vsel %vm117, %v49, 0
    %v134 = vsel %vm117, %v50, 0
    %v137 = vsel %vm117, %v51, 0
    %v140 = vsel %vm117, %v52, 0
    %v143 = vsel %vm117, %v53, 0
    %v146 = vsel %vm117, %v54, 0
    %v149 = vsel %vm117, %v55, 0
    %v152 = vsel %vm117, %v56, 0
    %v155 = vsel %vm117, %v57, 0
    %v158 = vsel %vm117, %v58, 0
    %v161 = vsel %vm117, %v59, 0
    %v164 = vsel %vm117, %v60, 0
    %v167 = vsel %vm117, %v61, 0
    %v170 = vsel %vm117, %v62, 0
    %v173 = vsel %vm117, %v63, 0
    %v176 = vsel %vm117, %v64, 0
    %v179 = vsel %vm117, %v65, 0
    %v182 = vsel %vm117, %v66, 0
    %v185 = vsel %vm117, %v67, 0
    %v188 = vsel %vm117, %v68, 0
    %v191 = vsel %vm117, %v69, 0
    %v194 = vsel %vm117, %v70, 0
    %v197 = vsel %vm117, %v71, 0
    %v200 = vsel %vm117, %v72, 0
    %v203 = vsel %vm117, %v73, 0
    %v206 = vsel %vm117, %v74, 0
    %v209 = vsel %vm117, %v75, 0
    %v212 = vsel %vm117, %v76, 0
    %v215 = vsel %vm117, %v77, 0
    %v218 = vsel %vm117, %v78, 0
    %v221 = vsel %vm117, %v79, 0
    %v224 = vsel %vm117, %v80, 0
    %v227 = vsel %vm117, %v81, 0
    %v230 = vsel %vm117, %v82, 0
    %v233 = vsel %vm117, %v83, 0
    %v236 = vsel %vm117, %v84, 0
    %v239 = vsel %vm117, %v85, 0
    %v242 = vsel %vm117, %v86, 0
    %v245 = vsel %vm117, %v87, 0
    %v248 = vsel %vm117, %v88, 0
    %v251 = vsel %vm117, %v89, 0
    %v254 = vsel %vm117, %v90, 0
    %v257 = vsel %vm117, %v91, 0
    %v260 = vsel %vm117, %v92, 0
    %v263 = vsel %vm117, %v93, 0
    %v266 = vsel %vm117, %v94, 0
    %v269 = vsel %vm117, %v95, 0
    %v272 = vsel %vm117, %v96, 0
    %v275 = vsel %vm117, %v97, 0
    %v278 = vsel %vm117, %v98, 0
    %v281 = vsel %vm117, %v99, 0
    %v284 = vsel %vm117, %v100, 0
    %v287 = vsel %vm117, %v101, 0
    %v290 = vsel %vm117, %v102, 0
    %v293 = vsel %vm117, %v103, 0
    %v296 = vsel %vm117, %v104, 0
    %v299 = vsel %vm117, %v105, 0
    %v302 = vsel %vm117, %v106, 0
    %v305 = vsel %vm117, %v107, 0
    %v308 = vsel %vm117, %v108, 0
    %vm310 = vcmask 1042432
    %v312 = vsel %vm310, %v112, 0
    %314 = vmatpush.msra.mxu0 0.0
    %315 = vmatpush.msra.mxu0 0.0
    %316 = vmatpush.msra.mxu0 0.0
    %317 = vmatpush.msra.mxu0 0.0
    %318 = vmatpush.msra.mxu0 0.0
    %319 = vmatpush.msra.mxu0 0.0
    %320 = vmatpush.msra.mxu0 0.0
    %321 = vmatpush.msra.mxu0 0.0
    %322 = vmatpush.msra.mxu0 0.0
    %323 = vmatpush.msra.mxu0 0.0
    %324 = vmatpush.msra.mxu0 0.0
    %325 = vmatpush.msra.mxu0 0.0
    %326 = vmatpush.msra.mxu0 %v312
    %327 = vmatpush.msra.mxu0 %v111
    %328 = vmatpush.msra.mxu0 %v110
    %329 = vmatpush.msra.mxu0 %v109
    %330 = vmatmul.f32.gmra.mxu0 %v119
    %v331 = vpop.f32.mrf.mxu0
    %v332 = vadd.f32 %v115, %v331
    %333 = vmatmul.f32.gmra.mxu0 %v122
    %v334 = vpop.f32.mrf.mxu0
    %v335 = vadd.f32 %v115, %v334
    %336 = vmatmul.f32.gmra.mxu0 %v125
    %v337 = vpop.f32.mrf.mxu0
    %v338 = vadd.f32 %v115, %v337
    %339 = vmatmul.f32.gmra.mxu0 %v128
    %v340 = vpop.f32.mrf.mxu0
    %v341 = vadd.f32 %v115, %v340
    %342 = vmatmul.f32.gmra.mxu0 %v131
    %v343 = vpop.f32.mrf.mxu0
    %v344 = vadd.f32 %v115, %v343
    %345 = vmatmul.f32.gmra.mxu0 %v134
    %v346 = vpop.f32.mrf.mxu0
    %v347 = vadd.f32 %v115, %v346
    %348 = vmatmul.f32.gmra.mxu0 %v137
    %v349 = vpop.f32.mrf.mxu0
    %v350 = vadd.f32 %v115, %v349
    %351 = vmatmul.f32.gmra.mxu0 %v140
    %v352 = vpop.f32.mrf.mxu0
    %v353 = vadd.f32 %v115, %v352
    %354 = vmatmul.f32.gmra.mxu0 %v143
    %v355 = vpop.f32.mrf.mxu0
    %v356 = vadd.f32 %v115, %v355
    %357 = vmatmul.f32.gmra.mxu0 %v146
    %v358 = vpop.f32.mrf.mxu0
    %v359 = vadd.f32 %v115, %v358
    %360 = vmatmul.f32.gmra.mxu0 %v149
    %v361 = vpop.f32.mrf.mxu0
    %v362 = vadd.f32 %v115, %v361
    %363 = vmatmul.f32.gmra.mxu0 %v152
    %v364 = vpop.f32.mrf.mxu0
    %v365 = vadd.f32 %v115, %v364
    %366 = vmatmul.f32.gmra.mxu0 %v155
    %v367 = vpop.f32.mrf.mxu0
    %v368 = vadd.f32 %v115, %v367
    %369 = vmatmul.f32.gmra.mxu0 %v158
    %v370 = vpop.f32.mrf.mxu0
    %v371 = vadd.f32 %v115, %v370
    %372 = vmatmul.f32.gmra.mxu0 %v161
    %v373 = vpop.f32.mrf.mxu0
    %v374 = vadd.f32 %v115, %v373
    %375 = vmatmul.f32.gmra.mxu0 %v164
    %v376 = vpop.f32.mrf.mxu0
    %v377 = vadd.f32 %v115, %v376
    %378 = vmatmul.f32.gmra.mxu0 %v167
    %v379 = vpop.f32.mrf.mxu0
    %v380 = vadd.f32 %v115, %v379
    %381 = vmatmul.f32.gmra.mxu0 %v170
    %v382 = vpop.f32.mrf.mxu0
    %v383 = vadd.f32 %v115, %v382
    %384 = vmatmul.f32.gmra.mxu0 %v173
    %v385 = vpop.f32.mrf.mxu0
    %v386 = vadd.f32 %v115, %v385
    %387 = vmatmul.f32.gmra.mxu0 %v176
    %v388 = vpop.f32.mrf.mxu0
    %v389 = vadd.f32 %v115, %v388
    %390 = vmatmul.f32.gmra.mxu0 %v179
    %v391 = vpop.f32.mrf.mxu0
    %v392 = vadd.f32 %v115, %v391
    %393 = vmatmul.f32.gmra.mxu0 %v182
    %v394 = vpop.f32.mrf.mxu0
    %v395 = vadd.f32 %v115, %v394
    %396 = vmatmul.f32.gmra.mxu0 %v185
    %v397 = vpop.f32.mrf.mxu0
    %v398 = vadd.f32 %v115, %v397
    %399 = vmatmul.f32.gmra.mxu0 %v188
    %v400 = vpop.f32.mrf.mxu0
    %v401 = vadd.f32 %v115, %v400
    %402 = vmatmul.f32.gmra.mxu0 %v191
    %v403 = vpop.f32.mrf.mxu0
    %v404 = vadd.f32 %v115, %v403
    %405 = vmatmul.f32.gmra.mxu0 %v194
    %v406 = vpop.f32.mrf.mxu0
    %v407 = vadd.f32 %v115, %v406
    %408 = vmatmul.f32.gmra.mxu0 %v197
    %v409 = vpop.f32.mrf.mxu0
    %v410 = vadd.f32 %v115, %v409
    %411 = vmatmul.f32.gmra.mxu0 %v200
    %v412 = vpop.f32.mrf.mxu0
    %v413 = vadd.f32 %v115, %v412
    %414 = vmatmul.f32.gmra.mxu0 %v203
    %v415 = vpop.f32.mrf.mxu0
    %v416 = vadd.f32 %v115, %v415
    %417 = vmatmul.f32.gmra.mxu0 %v206
    %v418 = vpop.f32.mrf.mxu0
    %v419 = vadd.f32 %v115, %v418
    %420 = vmatmul.f32.gmra.mxu0 %v209
    %v421 = vpop.f32.mrf.mxu0
    %v422 = vadd.f32 %v115, %v421
    %423 = vmatmul.f32.gmra.mxu0 %v212
    %v424 = vpop.f32.mrf.mxu0
    %v425 = vadd.f32 %v115, %v424
    %426 = vmatmul.f32.gmra.mxu0 %v215
    %v427 = vpop.f32.mrf.mxu0
    %v428 = vadd.f32 %v115, %v427
    %429 = vmatmul.f32.gmra.mxu0 %v218
    %v430 = vpop.f32.mrf.mxu0
    %v431 = vadd.f32 %v115, %v430
    %432 = vmatmul.f32.gmra.mxu0 %v221
    %v433 = vpop.f32.mrf.mxu0
    %v434 = vadd.f32 %v115, %v433
    %435 = vmatmul.f32.gmra.mxu0 %v224
    %v436 = vpop.f32.mrf.mxu0
    %v437 = vadd.f32 %v115, %v436
    %438 = vmatmul.f32.gmra.mxu0 %v227
    %v439 = vpop.f32.mrf.mxu0
    %v440 = vadd.f32 %v115, %v439
    %441 = vmatmul.f32.gmra.mxu0 %v230
    %v442 = vpop.f32.mrf.mxu0
    %v443 = vadd.f32 %v115, %v442
    %444 = vmatmul.f32.gmra.mxu0 %v233
    %v445 = vpop.f32.mrf.mxu0
    %v446 = vadd.f32 %v115, %v445
    %447 = vmatmul.f32.gmra.mxu0 %v236
    %v448 = vpop.f32.mrf.mxu0
    %v449 = vadd.f32 %v115, %v448
    %450 = vmatmul.f32.gmra.mxu0 %v239
    %v451 = vpop.f32.mrf.mxu0
    %v452 = vadd.f32 %v115, %v451
    %453 = vmatmul.f32.gmra.mxu0 %v242
    %v454 = vpop.f32.mrf.mxu0
    %v455 = vadd.f32 %v115, %v454
    %456 = vmatmul.f32.gmra.mxu0 %v245
    %v457 = vpop.f32.mrf.mxu0
    %v458 = vadd.f32 %v115, %v457
    %459 = vmatmul.f32.gmra.mxu0 %v248
    %v460 = vpop.f32.mrf.mxu0
    %v461 = vadd.f32 %v115, %v460
    %462 = vmatmul.f32.gmra.mxu0 %v251
    %v463 = vpop.f32.mrf.mxu0
    %v464 = vadd.f32 %v115, %v463
    %465 = vmatmul.f32.gmra.mxu0 %v254
    %v466 = vpop.f32.mrf.mxu0
    %v467 = vadd.f32 %v115, %v466
    %468 = vmatmul.f32.gmra.mxu0 %v257
    %v469 = vpop.f32.mrf.mxu0
    %v470 = vadd.f32 %v115, %v469
    %471 = vmatmul.f32.gmra.mxu0 %v260
    %v472 = vpop.f32.mrf.mxu0
    %v473 = vadd.f32 %v115, %v472
    %474 = vmatmul.f32.gmra.mxu0 %v263
    %v475 = vpop.f32.mrf.mxu0
    %v476 = vadd.f32 %v115, %v475
    %477 = vmatmul.f32.gmra.mxu0 %v266
    %v478 = vpop.f32.mrf.mxu0
    %v479 = vadd.f32 %v115, %v478
    %480 = vmatmul.f32.gmra.mxu0 %v269
    %v481 = vpop.f32.mrf.mxu0
    %v482 = vadd.f32 %v115, %v481
    %483 = vmatmul.f32.gmra.mxu0 %v272
    %v484 = vpop.f32.mrf.mxu0
    %v485 = vadd.f32 %v115, %v484
    %486 = vmatmul.f32.gmra.mxu0 %v275
    %v487 = vpop.f32.mrf.mxu0
    %v488 = vadd.f32 %v115, %v487
    %489 = vmatmul.f32.gmra.mxu0 %v278
    %v490 = vpop.f32.mrf.mxu0
    %v491 = vadd.f32 %v115, %v490
    %492 = vmatmul.f32.gmra.mxu0 %v281
    %v493 = vpop.f32.mrf.mxu0
    %v494 = vadd.f32 %v115, %v493
    %495 = vmatmul.f32.gmra.mxu0 %v284
    %v496 = vpop.f32.mrf.mxu0
    %v497 = vadd.f32 %v115, %v496
    %498 = vmatmul.f32.gmra.mxu0 %v287
    %v499 = vpop.f32.mrf.mxu0
    %v500 = vadd.f32 %v115, %v499
    %501 = vmatmul.f32.gmra.mxu0 %v290
    %v502 = vpop.f32.mrf.mxu0
    %v503 = vadd.f32 %v115, %v502
    %504 = vmatmul.f32.gmra.mxu0 %v293
    %v505 = vpop.f32.mrf.mxu0
    %v506 = vadd.f32 %v115, %v505
    %507 = vmatmul.f32.gmra.mxu0 %v296
    %v508 = vpop.f32.mrf.mxu0
    %v509 = vadd.f32 %v115, %v508
    %510 = vmatmul.f32.gmra.mxu0 %v299
    %v511 = vpop.f32.mrf.mxu0
    %v512 = vadd.f32 %v115, %v511
    %513 = vmatmul.f32.gmra.mxu0 %v302
    %v514 = vpop.f32.mrf.mxu0
    %v515 = vadd.f32 %v115, %v514
    %516 = vmatmul.f32.gmra.mxu0 %v305
    %v517 = vpop.f32.mrf.mxu0
    %v518 = vadd.f32 %v115, %v517
    %519 = vmatmul.f32.gmra.mxu0 %v308
    %v520 = vpop.f32.mrf.mxu0
    %v521 = vadd.f32 %v115, %v520
    %522 = vdwg.mxu0
    %v523 = vmax.f32 %v332, 0.0
    %v524 = vmax.f32 %v335, 0.0
    %v525 = vmax.f32 %v338, 0.0
    %v526 = vmax.f32 %v341, 0.0
    %v527 = vmax.f32 %v344, 0.0
    %v528 = vmax.f32 %v347, 0.0
    %v529 = vmax.f32 %v350, 0.0
    %v530 = vmax.f32 %v353, 0.0
    %v531 = vmax.f32 %v356, 0.0
    %v532 = vmax.f32 %v359, 0.0
    %v533 = vmax.f32 %v362, 0.0
    %v534 = vmax.f32 %v365, 0.0
    %v535 = vmax.f32 %v368, 0.0
    %v536 = vmax.f32 %v371, 0.0
    %v537 = vmax.f32 %v374, 0.0
    %v538 = vmax.f32 %v377, 0.0
    %v539 = vmax.f32 %v380, 0.0
    %v540 = vmax.f32 %v383, 0.0
    %v541 = vmax.f32 %v386, 0.0
    %v542 = vmax.f32 %v389, 0.0
    %v543 = vmax.f32 %v392, 0.0
    %v544 = vmax.f32 %v395, 0.0
    %v545 = vmax.f32 %v398, 0.0
    %v546 = vmax.f32 %v401, 0.0
    %v547 = vmax.f32 %v404, 0.0
    %v548 = vmax.f32 %v407, 0.0
    %v549 = vmax.f32 %v410, 0.0
    %v550 = vmax.f32 %v413, 0.0
    %v551 = vmax.f32 %v416, 0.0
    %v552 = vmax.f32 %v419, 0.0
    %v553 = vmax.f32 %v422, 0.0
    %v554 = vmax.f32 %v425, 0.0
    %v555 = vmax.f32 %v428, 0.0
    %v556 = vmax.f32 %v431, 0.0
    %v557 = vmax.f32 %v434, 0.0
    %v558 = vmax.f32 %v437, 0.0
    %v559 = vmax.f32 %v440, 0.0
    %v560 = vmax.f32 %v443, 0.0
    %v561 = vmax.f32 %v446, 0.0
    %v562 = vmax.f32 %v449, 0.0
    %v563 = vmax.f32 %v452, 0.0
    %v564 = vmax.f32 %v455, 0.0
    %v565 = vmax.f32 %v458, 0.0
    %v566 = vmax.f32 %v461, 0.0
    %v567 = vmax.f32 %v464, 0.0
    %v568 = vmax.f32 %v467, 0.0
    %v569 = vmax.f32 %v470, 0.0
    %v570 = vmax.f32 %v473, 0.0
    %v571 = vmax.f32 %v476, 0.0
    %v572 = vmax.f32 %v479, 0.0
    %v573 = vmax.f32 %v482, 0.0
    %v574 = vmax.f32 %v485, 0.0
    %v575 = vmax.f32 %v488, 0.0
    %v576 = vmax.f32 %v491, 0.0
    %v577 = vmax.f32 %v494, 0.0
    %v578 = vmax.f32 %v497, 0.0
    %v579 = vmax.f32 %v500, 0.0
    %v580 = vmax.f32 %v503, 0.0
    %v581 = vmax.f32 %v506, 0.0
    %v582 = vmax.f32 %v509, 0.0
    %v583 = vmax.f32 %v512, 0.0
    %v584 = vmax.f32 %v515, 0.0
    %v585 = vmax.f32 %v518, 0.0
    %v586 = vmax.f32 %v521, 0.0
    %vm587 = vcmask 261120
    %588 = vst.msk [vmem:[#allocation2] sm:$0xff] %vm587, %v523
    %589 = vst.msk [vmem:[#allocation2 + $0x8] sm:$0xff] %vm587, %v524
    %590 = vst.msk [vmem:[#allocation2 + $0x10] sm:$0xff] %vm587, %v525
    %591 = vst.msk [vmem:[#allocation2 + $0x18] sm:$0xff] %vm587, %v526
    %592 = vst.msk [vmem:[#allocation2 + $0x20] sm:$0xff] %vm587, %v527
    %593 = vst.msk [vmem:[#allocation2 + $0x28] sm:$0xff] %vm587, %v528
    %594 = vst.msk [vmem:[#allocation2 + $0x30] sm:$0xff] %vm587, %v529
    %595 = vst.msk [vmem:[#allocation2 + $0x38] sm:$0xff] %vm587, %v530
    %596 = vst.msk [vmem:[#allocation2 + $0x40] sm:$0xff] %vm587, %v531
    %597 = vst.msk [vmem:[#allocation2 + $0x48] sm:$0xff] %vm587, %v532
    %598 = vst.msk [vmem:[#allocation2 + $0x50] sm:$0xff] %vm587, %v533
    %599 = vst.msk [vmem:[#allocation2 + $0x58] sm:$0xff] %vm587, %v534
    %600 = vst.msk [vmem:[#allocation2 + $0x60] sm:$0xff] %vm587, %v535
    %601 = vst.msk [vmem:[#allocation2 + $0x68] sm:$0xff] %vm587, %v536
    %602 = vst.msk [vmem:[#allocation2 + $0x70] sm:$0xff] %vm587, %v537
    %603 = vst.msk [vmem:[#allocation2 + $0x78] sm:$0xff] %vm587, %v538
    %604 = vst.msk [vmem:[#allocation2 + $0x80] sm:$0xff] %vm587, %v539
    %605 = vst.msk [vmem:[#allocation2 + $0x88] sm:$0xff] %vm587, %v540
    %606 = vst.msk [vmem:[#allocation2 + $0x90] sm:$0xff] %vm587, %v541
    %607 = vst.msk [vmem:[#allocation2 + $0x98] sm:$0xff] %vm587, %v542
    %608 = vst.msk [vmem:[#allocation2 + $0xa0] sm:$0xff] %vm587, %v543
    %609 = vst.msk [vmem:[#allocation2 + $0xa8] sm:$0xff] %vm587, %v544
    %610 = vst.msk [vmem:[#allocation2 + $0xb0] sm:$0xff] %vm587, %v545
    %611 = vst.msk [vmem:[#allocation2 + $0xb8] sm:$0xff] %vm587, %v546
    %612 = vst.msk [vmem:[#allocation2 + $0xc0] sm:$0xff] %vm587, %v547
    %613 = vst.msk [vmem:[#allocation2 + $0xc8] sm:$0xff] %vm587, %v548
    %614 = vst.msk [vmem:[#allocation2 + $0xd0] sm:$0xff] %vm587, %v549
    %615 = vst.msk [vmem:[#allocation2 + $0xd8] sm:$0xff] %vm587, %v550
    %616 = vst.msk [vmem:[#allocation2 + $0xe0] sm:$0xff] %vm587, %v551
    %617 = vst.msk [vmem:[#allocation2 + $0xe8] sm:$0xff] %vm587, %v552
    %618 = vst.msk [vmem:[#allocation2 + $0xf0] sm:$0xff] %vm587, %v553
    %619 = vst.msk [vmem:[#allocation2 + $0xf8] sm:$0xff] %vm587, %v554
    %620 = vst.msk [vmem:[#allocation2 + $0x100] sm:$0xff] %vm587, %v555
    %621 = vst.msk [vmem:[#allocation2 + $0x108] sm:$0xff] %vm587, %v556
    %622 = vst.msk [vmem:[#allocation2 + $0x110] sm:$0xff] %vm587, %v557
    %623 = vst.msk [vmem:[#allocation2 + $0x118] sm:$0xff] %vm587, %v558
    %624 = vst.msk [vmem:[#allocation2 + $0x120] sm:$0xff] %vm587, %v559
    %625 = vst.msk [vmem:[#allocation2 + $0x128] sm:$0xff] %vm587, %v560
    %626 = vst.msk [vmem:[#allocation2 + $0x130] sm:$0xff] %vm587, %v561
    %627 = vst.msk [vmem:[#allocation2 + $0x138] sm:$0xff] %vm587, %v562
    %628 = vst.msk [vmem:[#allocation2 + $0x140] sm:$0xff] %vm587, %v563
    %629 = vst.msk [vmem:[#allocation2 + $0x148] sm:$0xff] %vm587, %v564
    %630 = vst.msk [vmem:[#allocation2 + $0x150] sm:$0xff] %vm587, %v565
    %631 = vst.msk [vmem:[#allocation2 + $0x158] sm:$0xff] %vm587, %v566
    %632 = vst.msk [vmem:[#allocation2 + $0x160] sm:$0xff] %vm587, %v567
    %633 = vst.msk [vmem:[#allocation2 + $0x168] sm:$0xff] %vm587, %v568
    %634 = vst.msk [vmem:[#allocation2 + $0x170] sm:$0xff] %vm587, %v569
    %635 = vst.msk [vmem:[#allocation2 + $0x178] sm:$0xff] %vm587, %v570
    %636 = vst.msk [vmem:[#allocation2 + $0x180] sm:$0xff] %vm587, %v571
    %637 = vst.msk [vmem:[#allocation2 + $0x188] sm:$0xff] %vm587, %v572
    %638 = vst.msk [vmem:[#allocation2 + $0x190] sm:$0xff] %vm587, %v573
    %639 = vst.msk [vmem:[#allocation2 + $0x198] sm:$0xff] %vm587, %v574
    %640 = vst.msk [vmem:[#allocation2 + $0x1a0] sm:$0xff] %vm587, %v575
    %641 = vst.msk [vmem:[#allocation2 + $0x1a8] sm:$0xff] %vm587, %v576
    %642 = vst.msk [vmem:[#allocation2 + $0x1b0] sm:$0xff] %vm587, %v577
    %643 = vst.msk [vmem:[#allocation2 + $0x1b8] sm:$0xff] %vm587, %v578
    %644 = vst.msk [vmem:[#allocation2 + $0x1c0] sm:$0xff] %vm587, %v579
    %645 = vst.msk [vmem:[#allocation2 + $0x1c8] sm:$0xff] %vm587, %v580
    %646 = vst.msk [vmem:[#allocation2 + $0x1d0] sm:$0xff] %vm587, %v581
    %647 = vst.msk [vmem:[#allocation2 + $0x1d8] sm:$0xff] %vm587, %v582
    %648 = vst.msk [vmem:[#allocation2 + $0x1e0] sm:$0xff] %vm587, %v583
    %649 = vst.msk [vmem:[#allocation2 + $0x1e8] sm:$0xff] %vm587, %v584
    %650 = vst.msk [vmem:[#allocation2 + $0x1f0] sm:$0xff] %vm587, %v585
    %651 = vst.msk [vmem:[#allocation2 + $0x1f8] sm:$0xff] %vm587, %v586
    %v652 = vld [vmem:[#allocation2] sm:$0xff]
    %v653 = vld [vmem:[#allocation2 + $0x8] sm:$0xff]
    %v654 = vld [vmem:[#allocation2 + $0x20] sm:$0xff]
    %v655 = vld [vmem:[#allocation2 + $0x28] sm:$0xff]
    %v656 = vld [vmem:[#allocation2 + $0x40] sm:$0xff]
    %v657 = vld [vmem:[#allocation2 + $0x48] sm:$0xff]
    %v658 = vld [vmem:[#allocation2 + $0x60] sm:$0xff]
    %v659 = vld [vmem:[#allocation2 + $0x68] sm:$0xff]
    %v660 = vld [vmem:[#allocation2 + $0x80] sm:$0xff]
    %v661 = vld [vmem:[#allocation2 + $0x88] sm:$0xff]
    %v662 = vld [vmem:[#allocation2 + $0xa0] sm:$0xff]
    %v663 = vld [vmem:[#allocation2 + $0xa8] sm:$0xff]
    %v664 = vld [vmem:[#allocation2 + $0xc0] sm:$0xff]
    %v665 = vld [vmem:[#allocation2 + $0xc8] sm:$0xff]
    %v666 = vld [vmem:[#allocation2 + $0xe0] sm:$0xff]
    %v667 = vld [vmem:[#allocation2 + $0xe8] sm:$0xff]
    %v668 = vld [vmem:[#allocation2 + $0x100] sm:$0xff]
    %v669 = vld [vmem:[#allocation2 + $0x108] sm:$0xff]
    %v670 = vld [vmem:[#allocation2 + $0x120] sm:$0xff]
    %v671 = vld [vmem:[#allocation2 + $0x128] sm:$0xff]
    %v672 = vld [vmem:[#allocation2 + $0x140] sm:$0xff]
    %v673 = vld [vmem:[#allocation2 + $0x148] sm:$0xff]
    %v674 = vld [vmem:[#allocation2 + $0x160] sm:$0xff]
    %v675 = vld [vmem:[#allocation2 + $0x168] sm:$0xff]
    %v676 = vld [vmem:[#allocation2 + $0x180] sm:$0xff]
    %v677 = vld [vmem:[#allocation2 + $0x188] sm:$0xff]
    %v678 = vld [vmem:[#allocation2 + $0x1a0] sm:$0xff]
    %v679 = vld [vmem:[#allocation2 + $0x1a8] sm:$0xff]
    %v680 = vld [vmem:[#allocation2 + $0x1c0] sm:$0xff]
    %v681 = vld [vmem:[#allocation2 + $0x1c8] sm:$0xff]
    %v682 = vld [vmem:[#allocation2 + $0x1e0] sm:$0xff]
    %v683 = vld [vmem:[#allocation2 + $0x1e8] sm:$0xff]
    %s684 = scalar_lea.vmem [#allocation2], 16
    %v685 = vld [vmem:[%s684] sm:$0xff]
    %v686 = vld [vmem:[%s684 + $0x8] sm:$0xff]
    %v687 = vld [vmem:[%s684 + $0x20] sm:$0xff]
    %v688 = vld [vmem:[%s684 + $0x28] sm:$0xff]
    %v689 = vld [vmem:[%s684 + $0x40] sm:$0xff]
    %v690 = vld [vmem:[%s684 + $0x48] sm:$0xff]
    %v691 = vld [vmem:[%s684 + $0x60] sm:$0xff]
    %v692 = vld [vmem:[%s684 + $0x68] sm:$0xff]
    %v693 = vld [vmem:[%s684 + $0x80] sm:$0xff]
    %v694 = vld [vmem:[%s684 + $0x88] sm:$0xff]
    %v695 = vld [vmem:[%s684 + $0xa0] sm:$0xff]
    %v696 = vld [vmem:[%s684 + $0xa8] sm:$0xff]
    %v697 = vld [vmem:[%s684 + $0xc0] sm:$0xff]
    %v698 = vld [vmem:[%s684 + $0xc8] sm:$0xff]
    %v699 = vld [vmem:[%s684 + $0xe0] sm:$0xff]
    %v700 = vld [vmem:[%s684 + $0xe8] sm:$0xff]
    %v701 = vld [vmem:[%s684 + $0x100] sm:$0xff]
    %v702 = vld [vmem:[%s684 + $0x108] sm:$0xff]
    %v703 = vld [vmem:[%s684 + $0x120] sm:$0xff]
    %v704 = vld [vmem:[%s684 + $0x128] sm:$0xff]
    %v705 = vld [vmem:[%s684 + $0x140] sm:$0xff]
    %v706 = vld [vmem:[%s684 + $0x148] sm:$0xff]
    %v707 = vld [vmem:[%s684 + $0x160] sm:$0xff]
    %v708 = vld [vmem:[%s684 + $0x168] sm:$0xff]
    %v709 = vld [vmem:[%s684 + $0x180] sm:$0xff]
    %v710 = vld [vmem:[%s684 + $0x188] sm:$0xff]
    %v711 = vld [vmem:[%s684 + $0x1a0] sm:$0xff]
    %v712 = vld [vmem:[%s684 + $0x1a8] sm:$0xff]
    %v713 = vld [vmem:[%s684 + $0x1c0] sm:$0xff]
    %v714 = vld [vmem:[%s684 + $0x1c8] sm:$0xff]
    %v715 = vld [vmem:[%s684 + $0x1e0] sm:$0xff]
    %v716 = vld [vmem:[%s684 + $0x1e8] sm:$0xff]
    %v717 = vmax.f32 %v652, %v685
    %v718 = vmax.f32 %v653, %v686
    %v719 = vmax.f32 %v654, %v687
    %v720 = vmax.f32 %v655, %v688
    %v721 = vmax.f32 %v656, %v689
    %v722 = vmax.f32 %v657, %v690
    %v723 = vmax.f32 %v658, %v691
    %v724 = vmax.f32 %v659, %v692
    %v725 = vmax.f32 %v660, %v693
    %v726 = vmax.f32 %v661, %v694
    %v727 = vmax.f32 %v662, %v695
    %v728 = vmax.f32 %v663, %v696
    %v729 = vmax.f32 %v664, %v697
    %v730 = vmax.f32 %v665, %v698
    %v731 = vmax.f32 %v666, %v699
    %v732 = vmax.f32 %v667, %v700
    %v733 = vmax.f32 %v668, %v701
    %v734 = vmax.f32 %v669, %v702
    %v735 = vmax.f32 %v670, %v703
    %v736 = vmax.f32 %v671, %v704
    %v737 = vmax.f32 %v672, %v705
    %v738 = vmax.f32 %v673, %v706
    %v739 = vmax.f32 %v674, %v707
    %v740 = vmax.f32 %v675, %v708
    %v741 = vmax.f32 %v676, %v709
    %v742 = vmax.f32 %v677, %v710
    %v743 = vmax.f32 %v678, %v711
    %v744 = vmax.f32 %v679, %v712
    %v745 = vmax.f32 %v680, %v713
    %v746 = vmax.f32 %v681, %v714
    %v747 = vmax.f32 %v682, %v715
    %v748 = vmax.f32 %v683, %v716
    %749 = vst.msk [vmem:[#allocation3] sm:$0xff] %vm587, %v717
    %750 = vst.msk [vmem:[#allocation3 + $0x8] sm:$0xff] %vm587, %v718
    %751 = vst.msk [vmem:[#allocation3 + $0x10] sm:$0xff] %vm587, %v719
    %752 = vst.msk [vmem:[#allocation3 + $0x18] sm:$0xff] %vm587, %v720
    %753 = vst.msk [vmem:[#allocation3 + $0x20] sm:$0xff] %vm587, %v721
    %754 = vst.msk [vmem:[#allocation3 + $0x28] sm:$0xff] %vm587, %v722
    %755 = vst.msk [vmem:[#allocation3 + $0x30] sm:$0xff] %vm587, %v723
    %756 = vst.msk [vmem:[#allocation3 + $0x38] sm:$0xff] %vm587, %v724
    %757 = vst.msk [vmem:[#allocation3 + $0x40] sm:$0xff] %vm587, %v725
    %758 = vst.msk [vmem:[#allocation3 + $0x48] sm:$0xff] %vm587, %v726
    %759 = vst.msk [vmem:[#allocation3 + $0x50] sm:$0xff] %vm587, %v727
    %760 = vst.msk [vmem:[#allocation3 + $0x58] sm:$0xff] %vm587, %v728
    %761 = vst.msk [vmem:[#allocation3 + $0x60] sm:$0xff] %vm587, %v729
    %762 = vst.msk [vmem:[#allocation3 + $0x68] sm:$0xff] %vm587, %v730
    %763 = vst.msk [vmem:[#allocation3 + $0x70] sm:$0xff] %vm587, %v731
    %764 = vst.msk [vmem:[#allocation3 + $0x78] sm:$0xff] %vm587, %v732
    %765 = vst.msk [vmem:[#allocation3 + $0x80] sm:$0xff] %vm587, %v733
    %766 = vst.msk [vmem:[#allocation3 + $0x88] sm:$0xff] %vm587, %v734
    %767 = vst.msk [vmem:[#allocation3 + $0x90] sm:$0xff] %vm587, %v735
    %768 = vst.msk [vmem:[#allocation3 + $0x98] sm:$0xff] %vm587, %v736
    %769 = vst.msk [vmem:[#allocation3 + $0xa0] sm:$0xff] %vm587, %v737
    %770 = vst.msk [vmem:[#allocation3 + $0xa8] sm:$0xff] %vm587, %v738
    %771 = vst.msk [vmem:[#allocation3 + $0xb0] sm:$0xff] %vm587, %v739
    %772 = vst.msk [vmem:[#allocation3 + $0xb8] sm:$0xff] %vm587, %v740
    %773 = vst.msk [vmem:[#allocation3 + $0xc0] sm:$0xff] %vm587, %v741
    %774 = vst.msk [vmem:[#allocation3 + $0xc8] sm:$0xff] %vm587, %v742
    %775 = vst.msk [vmem:[#allocation3 + $0xd0] sm:$0xff] %vm587, %v743
    %776 = vst.msk [vmem:[#allocation3 + $0xd8] sm:$0xff] %vm587, %v744
    %777 = vst.msk [vmem:[#allocation3 + $0xe0] sm:$0xff] %vm587, %v745
    %778 = vst.msk [vmem:[#allocation3 + $0xe8] sm:$0xff] %vm587, %v746
    %779 = vst.msk [vmem:[#allocation3 + $0xf0] sm:$0xff] %vm587, %v747
    %780 = vst.msk [vmem:[#allocation3 + $0xf8] sm:$0xff] %vm587, %v748
    %v781 = vld [vmem:[#allocation3] ss:$2 sm:$0xff]
    %s782 = scalar_lea.vmem [#allocation3], 16
    %v783 = vld [vmem:[%s782] ss:$2 sm:$0xff]
    %s784 = scalar_lea.vmem [#allocation3], 32
    %v785 = vld [vmem:[%s784] ss:$2 sm:$0xff]
    %s786 = scalar_lea.vmem [#allocation3], 48
    %v787 = vld [vmem:[%s786] ss:$2 sm:$0xff]
    %s788 = scalar_lea.vmem [#allocation3], 64
    %v789 = vld [vmem:[%s788] ss:$2 sm:$0xff]
    %s790 = scalar_lea.vmem [#allocation3], 80
    %v791 = vld [vmem:[%s790] ss:$2 sm:$0xff]
    %s792 = scalar_lea.vmem [#allocation3], 96
    %v793 = vld [vmem:[%s792] ss:$2 sm:$0xff]
    %s794 = scalar_lea.vmem [#allocation3], 112
    %v795 = vld [vmem:[%s794] ss:$2 sm:$0xff]
    %s796 = scalar_lea.vmem [#allocation3], 128
    %v797 = vld [vmem:[%s796] ss:$2 sm:$0xff]
    %s798 = scalar_lea.vmem [#allocation3], 144
    %v799 = vld [vmem:[%s798] ss:$2 sm:$0xff]
    %s800 = scalar_lea.vmem [#allocation3], 160
    %v801 = vld [vmem:[%s800] ss:$2 sm:$0xff]
    %s802 = scalar_lea.vmem [#allocation3], 176
    %v803 = vld [vmem:[%s802] ss:$2 sm:$0xff]
    %s804 = scalar_lea.vmem [#allocation3], 192
    %v805 = vld [vmem:[%s804] ss:$2 sm:$0xff]
    %s806 = scalar_lea.vmem [#allocation3], 208
    %v807 = vld [vmem:[%s806] ss:$2 sm:$0xff]
    %s808 = scalar_lea.vmem [#allocation3], 224
    %v809 = vld [vmem:[%s808] ss:$2 sm:$0xff]
    %s810 = scalar_lea.vmem [#allocation3], 240
    %v811 = vld [vmem:[%s810] ss:$2 sm:$0xff]
    %s812 = scalar_lea.vmem [#allocation3], 1
    %v813 = vld [vmem:[%s812] ss:$2 sm:$0xff]
    %s814 = scalar_lea.vmem [#allocation3], 17
    %v815 = vld [vmem:[%s814] ss:$2 sm:$0xff]
    %s816 = scalar_lea.vmem [#allocation3], 33
    %v817 = vld [vmem:[%s816] ss:$2 sm:$0xff]
    %s818 = scalar_lea.vmem [#allocation3], 49
    %v819 = vld [vmem:[%s818] ss:$2 sm:$0xff]
    %s820 = scalar_lea.vmem [#allocation3], 65
    %v821 = vld [vmem:[%s820] ss:$2 sm:$0xff]
    %s822 = scalar_lea.vmem [#allocation3], 81
    %v823 = vld [vmem:[%s822] ss:$2 sm:$0xff]
    %s824 = scalar_lea.vmem [#allocation3], 97
    %v825 = vld [vmem:[%s824] ss:$2 sm:$0xff]
    %s826 = scalar_lea.vmem [#allocation3], 113
    %v827 = vld [vmem:[%s826] ss:$2 sm:$0xff]
    %s828 = scalar_lea.vmem [#allocation3], 129
    %v829 = vld [vmem:[%s828] ss:$2 sm:$0xff]
    %s830 = scalar_lea.vmem [#allocation3], 145
    %v831 = vld [vmem:[%s830] ss:$2 sm:$0xff]
    %s832 = scalar_lea.vmem [#allocation3], 161
    %v833 = vld [vmem:[%s832] ss:$2 sm:$0xff]
    %s834 = scalar_lea.vmem [#allocation3], 177
    %v835 = vld [vmem:[%s834] ss:$2 sm:$0xff]
    %s836 = scalar_lea.vmem [#allocation3], 193
    %v837 = vld [vmem:[%s836] ss:$2 sm:$0xff]
    %s838 = scalar_lea.vmem [#allocation3], 209
    %v839 = vld [vmem:[%s838] ss:$2 sm:$0xff]
    %s840 = scalar_lea.vmem [#allocation3], 225
    %v841 = vld [vmem:[%s840] ss:$2 sm:$0xff]
    %s842 = scalar_lea.vmem [#allocation3], 241
    %v843 = vld [vmem:[%s842] ss:$2 sm:$0xff]
    %v844 = vmax.f32 %v781, %v813
    %v845 = vmax.f32 %v783, %v815
    %v846 = vmax.f32 %v785, %v817
    %v847 = vmax.f32 %v787, %v819
    %v848 = vmax.f32 %v789, %v821
    %v849 = vmax.f32 %v791, %v823
    %v850 = vmax.f32 %v793, %v825
    %v851 = vmax.f32 %v795, %v827
    %v852 = vmax.f32 %v797, %v829
    %v853 = vmax.f32 %v799, %v831
    %v854 = vmax.f32 %v801, %v833
    %v855 = vmax.f32 %v803, %v835
    %v856 = vmax.f32 %v805, %v837
    %v857 = vmax.f32 %v807, %v839
    %v858 = vmax.f32 %v809, %v841
    %v859 = vmax.f32 %v811, %v843
    %860 = vst.msk [vmem:[#allocation4] sm:$0xff] %vm587, 0.0
    %vm861 = vcmask 254976
    %862 = vst.msk [vmem:[#allocation4 + $0x8] sm:$0x3] %vm861, 0.0
    %863 = vst.msk [vmem:[#allocation4 + $0x10] sm:$0xff] %vm587, 0.0
    %864 = vst.msk [vmem:[#allocation4 + $0x18] sm:$0x3] %vm861, 0.0
    %865 = vst.msk [vmem:[#allocation4 + $0x20] sm:$0xff] %vm587, 0.0
    %866 = vst.msk [vmem:[#allocation4 + $0x28] sm:$0x3] %vm861, 0.0
    %867 = vst.msk [vmem:[#allocation4 + $0x30] sm:$0xff] %vm587, 0.0
    %868 = vst.msk [vmem:[#allocation4 + $0x38] sm:$0x3] %vm861, 0.0
    %869 = vst.msk [vmem:[#allocation4 + $0x40] sm:$0xff] %vm587, 0.0
    %870 = vst.msk [vmem:[#allocation4 + $0x48] sm:$0x3] %vm861, 0.0
    %871 = vst.msk [vmem:[#allocation4 + $0x50] sm:$0xff] %vm587, 0.0
    %872 = vst.msk [vmem:[#allocation4 + $0x58] sm:$0x3] %vm861, 0.0
    %873 = vst.msk [vmem:[#allocation4 + $0x60] sm:$0xff] %vm587, 0.0
    %874 = vst.msk [vmem:[#allocation4 + $0x68] sm:$0x3] %vm861, 0.0
    %875 = vst.msk [vmem:[#allocation4 + $0x70] sm:$0xff] %vm587, 0.0
    %876 = vst.msk [vmem:[#allocation4 + $0x78] sm:$0x3] %vm861, 0.0
    %877 = vst.msk [vmem:[#allocation4 + $0x80] sm:$0xff] %vm587, 0.0
    %878 = vst.msk [vmem:[#allocation4 + $0x88] sm:$0x3] %vm861, 0.0
    %879 = vst.msk [vmem:[#allocation4 + $0x90] sm:$0xff] %vm587, 0.0
    %880 = vst.msk [vmem:[#allocation4 + $0x98] sm:$0x3] %vm861, 0.0
    %881 = vst.msk [vmem:[#allocation4 + $0xa0] sm:$0xff] %vm587, 0.0
    %882 = vst.msk [vmem:[#allocation4 + $0xa8] sm:$0x3] %vm861, 0.0
    %883 = vst.msk [vmem:[#allocation4 + $0xb0] sm:$0xff] %vm587, 0.0
    %884 = vst.msk [vmem:[#allocation4 + $0xb8] sm:$0x3] %vm861, 0.0
    %885 = vst.msk [vmem:[#allocation4 + $0xc0] sm:$0xff] %vm587, 0.0
    %886 = vst.msk [vmem:[#allocation4 + $0xc8] sm:$0x3] %vm861, 0.0
    %887 = vst.msk [vmem:[#allocation4 + $0xd0] sm:$0xff] %vm587, 0.0
    %888 = vst.msk [vmem:[#allocation4 + $0xd8] sm:$0x3] %vm861, 0.0
    %889 = vst.msk [vmem:[#allocation4 + $0xe0] sm:$0xff] %vm587, 0.0
    %890 = vst.msk [vmem:[#allocation4 + $0xe8] sm:$0x3] %vm861, 0.0
    %891 = vst.msk [vmem:[#allocation4 + $0xf0] sm:$0xff] %vm587, 0.0
    %892 = vst.msk [vmem:[#allocation4 + $0xf8] sm:$0x3] %vm861, 0.0
    %893 = vst.msk [vmem:[#allocation4 + $0x100] sm:$0xff] %vm587, 0.0
    %894 = vst.msk [vmem:[#allocation4 + $0x108] sm:$0x3] %vm861, 0.0
    %895 = vst.msk [vmem:[#allocation4 + $0x110] sm:$0xff] %vm587, 0.0
    %896 = vst.msk [vmem:[#allocation4 + $0x118] sm:$0x3] %vm861, 0.0
    %897 = vst.msk [vmem:[#allocation4 + $0x120] sm:$0xff] %vm587, 0.0
    %898 = vst.msk [vmem:[#allocation4 + $0x128] sm:$0x3] %vm861, 0.0
    %899 = vst.msk [vmem:[#allocation4 + $0x130] sm:$0xff] %vm587, 0.0
    %900 = vst.msk [vmem:[#allocation4 + $0x138] sm:$0x3] %vm861, 0.0
    %s901 = scalar_lea.vmem [#allocation4], 16
    %902 = vst.msk [vmem:[%s901 + $0x1] sm:$0xff] %vm587, %v844
    %903 = vst.msk [vmem:[%s901 + $0x11] sm:$0xff] %vm587, %v845
    %904 = vst.msk [vmem:[%s901 + $0x21] sm:$0xff] %vm587, %v846
    %905 = vst.msk [vmem:[%s901 + $0x31] sm:$0xff] %vm587, %v847
    %906 = vst.msk [vmem:[%s901 + $0x41] sm:$0xff] %vm587, %v848
    %907 = vst.msk [vmem:[%s901 + $0x51] sm:$0xff] %vm587, %v849
    %908 = vst.msk [vmem:[%s901 + $0x61] sm:$0xff] %vm587, %v850
    %909 = vst.msk [vmem:[%s901 + $0x71] sm:$0xff] %vm587, %v851
    %910 = vst.msk [vmem:[%s901 + $0xa1] sm:$0xff] %vm587, %v852
    %911 = vst.msk [vmem:[%s901 + $0xb1] sm:$0xff] %vm587, %v853
    %912 = vst.msk [vmem:[%s901 + $0xc1] sm:$0xff] %vm587, %v854
    %913 = vst.msk [vmem:[%s901 + $0xd1] sm:$0xff] %vm587, %v855
    %914 = vst.msk [vmem:[%s901 + $0xe1] sm:$0xff] %vm587, %v856
    %915 = vst.msk [vmem:[%s901 + $0xf1] sm:$0xff] %vm587, %v857
    %916 = vst.msk [vmem:[%s901 + $0x101] sm:$0xff] %vm587, %v858
    %917 = vst.msk [vmem:[%s901 + $0x111] sm:$0xff] %vm587, %v859
    %v918 = vld [vmem:[#allocation4] sm:$0xff]
    %v919 = vld [vmem:[#allocation4 + $0x10] sm:$0xff]
    %v920 = vld [vmem:[#allocation4 + $0x20] sm:$0xff]
    %v921 = vld [vmem:[#allocation4 + $0x30] sm:$0xff]
    %v922 = vld [vmem:[#allocation4 + $0x40] sm:$0xff]
    %v923 = vld [vmem:[#allocation4 + $0x50] sm:$0xff]
    %v924 = vld [vmem:[#allocation4 + $0x60] sm:$0xff]
    %v925 = vld [vmem:[#allocation4 + $0x70] sm:$0xff]
    %v926 = vld [vmem:[#allocation4 + $0xa0] sm:$0xff]
    %v927 = vld [vmem:[#allocation4 + $0xb0] sm:$0xff]
    %v928 = vld [vmem:[#allocation4 + $0xc0] sm:$0xff]
    %v929 = vld [vmem:[#allocation4 + $0xd0] sm:$0xff]
    %v930 = vld [vmem:[#allocation4 + $0xe0] sm:$0xff]
    %v931 = vld [vmem:[#allocation4 + $0xf0] sm:$0xff]
    %v932 = vld [vmem:[#allocation4 + $0x100] sm:$0xff]
    %v933 = vld [vmem:[#allocation4 + $0x110] sm:$0xff]
    %v934 = vld [vmem:[#allocation4 + $0x1] sm:$0xff]
    %v935 = vld [vmem:[#allocation4 + $0x11] sm:$0xff]
    %v936 = vld [vmem:[#allocation4 + $0x21] sm:$0xff]
    %v937 = vld [vmem:[#allocation4 + $0x31] sm:$0xff]
    %v938 = vld [vmem:[#allocation4 + $0x41] sm:$0xff]
    %v939 = vld [vmem:[#allocation4 + $0x51] sm:$0xff]
    %v940 = vld [vmem:[#allocation4 + $0x61] sm:$0xff]
    %v941 = vld [vmem:[#allocation4 + $0x71] sm:$0xff]
    %v942 = vld [vmem:[#allocation4 + $0xa1] sm:$0xff]
    %v943 = vld [vmem:[#allocation4 + $0xb1] sm:$0xff]
    %v944 = vld [vmem:[#allocation4 + $0xc1] sm:$0xff]
    %v945 = vld [vmem:[#allocation4 + $0xd1] sm:$0xff]
    %v946 = vld [vmem:[#allocation4 + $0xe1] sm:$0xff]
    %v947 = vld [vmem:[#allocation4 + $0xf1] sm:$0xff]
    %v948 = vld [vmem:[#allocation4 + $0x101] sm:$0xff]
    %v949 = vld [vmem:[#allocation4 + $0x111] sm:$0xff]
    %v950 = vld [vmem:[#allocation4 + $0x2] sm:$0xff]
    %v951 = vld [vmem:[#allocation4 + $0x12] sm:$0xff]
    %v952 = vld [vmem:[#allocation4 + $0x22] sm:$0xff]
    %v953 = vld [vmem:[#allocation4 + $0x32] sm:$0xff]
    %v954 = vld [vmem:[#allocation4 + $0x42] sm:$0xff]
    %v955 = vld [vmem:[#allocation4 + $0x52] sm:$0xff]
    %v956 = vld [vmem:[#allocation4 + $0x62] sm:$0xff]
    %v957 = vld [vmem:[#allocation4 + $0x72] sm:$0xff]
    %v958 = vld [vmem:[#allocation4 + $0xa2] sm:$0xff]
    %v959 = vld [vmem:[#allocation4 + $0xb2] sm:$0xff]
    %v960 = vld [vmem:[#allocation4 + $0xc2] sm:$0xff]
    %v961 = vld [vmem:[#allocation4 + $0xd2] sm:$0xff]
    %v962 = vld [vmem:[#allocation4 + $0xe2] sm:$0xff]
    %v963 = vld [vmem:[#allocation4 + $0xf2] sm:$0xff]
    %v964 = vld [vmem:[#allocation4 + $0x102] sm:$0xff]
    %v965 = vld [vmem:[#allocation4 + $0x112] sm:$0xff]
    %v966 = vld [vmem:[%s901] sm:$0xff]
    %v967 = vld [vmem:[%s901 + $0x10] sm:$0xff]
    %v968 = vld [vmem:[%s901 + $0x20] sm:$0xff]
    %v969 = vld [vmem:[%s901 + $0x30] sm:$0xff]
    %v970 = vld [vmem:[%s901 + $0x40] sm:$0xff]
    %v971 = vld [vmem:[%s901 + $0x50] sm:$0xff]
    %v972 = vld [vmem:[%s901 + $0x60] sm:$0xff]
    %v973 = vld [vmem:[%s901 + $0x70] sm:$0xff]
    %v974 = vld [vmem:[%s901 + $0xa0] sm:$0xff]
    %v975 = vld [vmem:[%s901 + $0xb0] sm:$0xff]
    %v976 = vld [vmem:[%s901 + $0xc0] sm:$0xff]
    %v977 = vld [vmem:[%s901 + $0xd0] sm:$0xff]
    %v978 = vld [vmem:[%s901 + $0xe0] sm:$0xff]
    %v979 = vld [vmem:[%s901 + $0xf0] sm:$0xff]
    %v980 = vld [vmem:[%s901 + $0x100] sm:$0xff]
    %v981 = vld [vmem:[%s901 + $0x110] sm:$0xff]
    %v982 = vld [vmem:[%s901 + $0x1] sm:$0xff]
    %v983 = vld [vmem:[%s901 + $0x11] sm:$0xff]
    %v984 = vld [vmem:[%s901 + $0x21] sm:$0xff]
    %v985 = vld [vmem:[%s901 + $0x31] sm:$0xff]
    %v986 = vld [vmem:[%s901 + $0x41] sm:$0xff]
    %v987 = vld [vmem:[%s901 + $0x51] sm:$0xff]
    %v988 = vld [vmem:[%s901 + $0x61] sm:$0xff]
    %v989 = vld [vmem:[%s901 + $0x71] sm:$0xff]
    %v990 = vld [vmem:[%s901 + $0xa1] sm:$0xff]
    %v991 = vld [vmem:[%s901 + $0xb1] sm:$0xff]
    %v992 = vld [vmem:[%s901 + $0xc1] sm:$0xff]
    %v993 = vld [vmem:[%s901 + $0xd1] sm:$0xff]
    %v994 = vld [vmem:[%s901 + $0xe1] sm:$0xff]
    %v995 = vld [vmem:[%s901 + $0xf1] sm:$0xff]
    %v996 = vld [vmem:[%s901 + $0x101] sm:$0xff]
    %v997 = vld [vmem:[%s901 + $0x111] sm:$0xff]
    %v998 = vld [vmem:[%s901 + $0x2] sm:$0xff]
    %v999 = vld [vmem:[%s901 + $0x12] sm:$0xff]
    %v1000 = vld [vmem:[%s901 + $0x22] sm:$0xff]
    %v1001 = vld [vmem:[%s901 + $0x32] sm:$0xff]
    %v1002 = vld [vmem:[%s901 + $0x42] sm:$0xff]
    %v1003 = vld [vmem:[%s901 + $0x52] sm:$0xff]
    %v1004 = vld [vmem:[%s901 + $0x62] sm:$0xff]
    %v1005 = vld [vmem:[%s901 + $0x72] sm:$0xff]
    %v1006 = vld [vmem:[%s901 + $0xa2] sm:$0xff]
    %v1007 = vld [vmem:[%s901 + $0xb2] sm:$0xff]
    %v1008 = vld [vmem:[%s901 + $0xc2] sm:$0xff]
    %v1009 = vld [vmem:[%s901 + $0xd2] sm:$0xff]
    %v1010 = vld [vmem:[%s901 + $0xe2] sm:$0xff]
    %v1011 = vld [vmem:[%s901 + $0xf2] sm:$0xff]
    %v1012 = vld [vmem:[%s901 + $0x102] sm:$0xff]
    %v1013 = vld [vmem:[%s901 + $0x112] sm:$0xff]
    %s1014 = scalar_lea.vmem [#allocation4], 32
    %v1015 = vld [vmem:[%s1014] sm:$0xff]
    %v1016 = vld [vmem:[%s1014 + $0x10] sm:$0xff]
    %v1017 = vld [vmem:[%s1014 + $0x20] sm:$0xff]
    %v1018 = vld [vmem:[%s1014 + $0x30] sm:$0xff]
    %v1019 = vld [vmem:[%s1014 + $0x40] sm:$0xff]
    %v1020 = vld [vmem:[%s1014 + $0x50] sm:$0xff]
    %v1021 = vld [vmem:[%s1014 + $0x60] sm:$0xff]
    %v1022 = vld [vmem:[%s1014 + $0x70] sm:$0xff]
    %v1023 = vld [vmem:[%s1014 + $0xa0] sm:$0xff]
    %v1024 = vld [vmem:[%s1014 + $0xb0] sm:$0xff]
    %v1025 = vld [vmem:[%s1014 + $0xc0] sm:$0xff]
    %v1026 = vld [vmem:[%s1014 + $0xd0] sm:$0xff]
    %v1027 = vld [vmem:[%s1014 + $0xe0] sm:$0xff]
    %v1028 = vld [vmem:[%s1014 + $0xf0] sm:$0xff]
    %v1029 = vld [vmem:[%s1014 + $0x100] sm:$0xff]
    %v1030 = vld [vmem:[%s1014 + $0x110] sm:$0xff]
    %v1031 = vld [vmem:[%s1014 + $0x1] sm:$0xff]
    %v1032 = vld [vmem:[%s1014 + $0x11] sm:$0xff]
    %v1033 = vld [vmem:[%s1014 + $0x21] sm:$0xff]
    %v1034 = vld [vmem:[%s1014 + $0x31] sm:$0xff]
    %v1035 = vld [vmem:[%s1014 + $0x41] sm:$0xff]
    %v1036 = vld [vmem:[%s1014 + $0x51] sm:$0xff]
    %v1037 = vld [vmem:[%s1014 + $0x61] sm:$0xff]
    %v1038 = vld [vmem:[%s1014 + $0x71] sm:$0xff]
    %v1039 = vld [vmem:[%s1014 + $0xa1] sm:$0xff]
    %v1040 = vld [vmem:[%s1014 + $0xb1] sm:$0xff]
    %v1041 = vld [vmem:[%s1014 + $0xc1] sm:$0xff]
    %v1042 = vld [vmem:[%s1014 + $0xd1] sm:$0xff]
    %v1043 = vld [vmem:[%s1014 + $0xe1] sm:$0xff]
    %v1044 = vld [vmem:[%s1014 + $0xf1] sm:$0xff]
    %v1045 = vld [vmem:[%s1014 + $0x101] sm:$0xff]
    %v1046 = vld [vmem:[%s1014 + $0x111] sm:$0xff]
    %v1047 = vld [vmem:[%s1014 + $0x2] sm:$0xff]
    %v1048 = vld [vmem:[%s1014 + $0x12] sm:$0xff]
    %v1049 = vld [vmem:[%s1014 + $0x22] sm:$0xff]
    %v1050 = vld [vmem:[%s1014 + $0x32] sm:$0xff]
    %v1051 = vld [vmem:[%s1014 + $0x42] sm:$0xff]
    %v1052 = vld [vmem:[%s1014 + $0x52] sm:$0xff]
    %v1053 = vld [vmem:[%s1014 + $0x62] sm:$0xff]
    %v1054 = vld [vmem:[%s1014 + $0x72] sm:$0xff]
    %v1055 = vld [vmem:[%s1014 + $0xa2] sm:$0xff]
    %v1056 = vld [vmem:[%s1014 + $0xb2] sm:$0xff]
    %v1057 = vld [vmem:[%s1014 + $0xc2] sm:$0xff]
    %v1058 = vld [vmem:[%s1014 + $0xd2] sm:$0xff]
    %v1059 = vld [vmem:[%s1014 + $0xe2] sm:$0xff]
    %v1060 = vld [vmem:[%s1014 + $0xf2] sm:$0xff]
    %v1061 = vld [vmem:[%s1014 + $0x102] sm:$0xff]
    %v1062 = vld [vmem:[%s1014 + $0x112] sm:$0xff]
    %1079 = vrot.lane.b32.xlu0 %v934, 32
    %v1080 = vpop.permute.xlu0 %1079
    %1081 = vrot.lane.b32.xlu0 %v935, 32
    %v1082 = vpop.permute.xlu0 %1081
    %1083 = vrot.lane.b32.xlu0 %v936, 32
    %v1084 = vpop.permute.xlu0 %1083
    %1085 = vrot.lane.b32.xlu0 %v937, 32
    %v1086 = vpop.permute.xlu0 %1085
    %1087 = vrot.lane.b32.xlu0 %v938, 32
    %v1088 = vpop.permute.xlu0 %1087
    %1089 = vrot.lane.b32.xlu0 %v939, 32
    %v1090 = vpop.permute.xlu0 %1089
    %1091 = vrot.lane.b32.xlu0 %v940, 32
    %v1092 = vpop.permute.xlu0 %1091
    %1093 = vrot.lane.b32.xlu0 %v941, 32
    %v1094 = vpop.permute.xlu0 %1093
    %1095 = vrot.lane.b32.xlu0 %v942, 32
    %v1096 = vpop.permute.xlu0 %1095
    %1097 = vrot.lane.b32.xlu0 %v943, 32
    %v1098 = vpop.permute.xlu0 %1097
    %1099 = vrot.lane.b32.xlu0 %v944, 32
    %v1100 = vpop.permute.xlu0 %1099
    %1101 = vrot.lane.b32.xlu0 %v945, 32
    %v1102 = vpop.permute.xlu0 %1101
    %1103 = vrot.lane.b32.xlu0 %v946, 32
    %v1104 = vpop.permute.xlu0 %1103
    %1105 = vrot.lane.b32.xlu0 %v947, 32
    %v1106 = vpop.permute.xlu0 %1105
    %1107 = vrot.lane.b32.xlu0 %v948, 32
    %v1108 = vpop.permute.xlu0 %1107
    %1109 = vrot.lane.b32.xlu0 %v949, 32
    %v1110 = vpop.permute.xlu0 %1109
    %1143 = vrot.lane.b32.xlu0 %v950, 64
    %v1144 = vpop.permute.xlu0 %1143
    %1145 = vrot.lane.b32.xlu0 %v951, 64
    %v1146 = vpop.permute.xlu0 %1145
    %1147 = vrot.lane.b32.xlu0 %v952, 64
    %v1148 = vpop.permute.xlu0 %1147
    %1149 = vrot.lane.b32.xlu0 %v953, 64
    %v1150 = vpop.permute.xlu0 %1149
    %1151 = vrot.lane.b32.xlu0 %v954, 64
    %v1152 = vpop.permute.xlu0 %1151
    %1153 = vrot.lane.b32.xlu0 %v955, 64
    %v1154 = vpop.permute.xlu0 %1153
    %1155 = vrot.lane.b32.xlu0 %v956, 64
    %v1156 = vpop.permute.xlu0 %1155
    %1157 = vrot.lane.b32.xlu0 %v957, 64
    %v1158 = vpop.permute.xlu0 %1157
    %1159 = vrot.lane.b32.xlu0 %v958, 64
    %v1160 = vpop.permute.xlu0 %1159
    %1161 = vrot.lane.b32.xlu0 %v959, 64
    %v1162 = vpop.permute.xlu0 %1161
    %1163 = vrot.lane.b32.xlu0 %v960, 64
    %v1164 = vpop.permute.xlu0 %1163
    %1165 = vrot.lane.b32.xlu0 %v961, 64
    %v1166 = vpop.permute.xlu0 %1165
    %1167 = vrot.lane.b32.xlu0 %v962, 64
    %v1168 = vpop.permute.xlu0 %1167
    %1169 = vrot.lane.b32.xlu0 %v963, 64
    %v1170 = vpop.permute.xlu0 %1169
    %1171 = vrot.lane.b32.xlu0 %v964, 64
    %v1172 = vpop.permute.xlu0 %1171
    %1173 = vrot.lane.b32.xlu0 %v965, 64
    %v1174 = vpop.permute.xlu0 %1173
    %1207 = vrot.lane.b32.xlu0 %v966, 96
    %v1208 = vpop.permute.xlu0 %1207
    %1209 = vrot.lane.b32.xlu0 %v967, 96
    %v1210 = vpop.permute.xlu0 %1209
    %1211 = vrot.lane.b32.xlu0 %v968, 96
    %v1212 = vpop.permute.xlu0 %1211
    %1213 = vrot.lane.b32.xlu0 %v969, 96
    %v1214 = vpop.permute.xlu0 %1213
    %1215 = vrot.lane.b32.xlu0 %v970, 96
    %v1216 = vpop.permute.xlu0 %1215
    %1217 = vrot.lane.b32.xlu0 %v971, 96
    %v1218 = vpop.permute.xlu0 %1217
    %1219 = vrot.lane.b32.xlu0 %v972, 96
    %v1220 = vpop.permute.xlu0 %1219
    %1221 = vrot.lane.b32.xlu0 %v973, 96
    %v1222 = vpop.permute.xlu0 %1221
    %1223 = vrot.lane.b32.xlu0 %v974, 96
    %v1224 = vpop.permute.xlu0 %1223
    %1225 = vrot.lane.b32.xlu0 %v975, 96
    %v1226 = vpop.permute.xlu0 %1225
    %1227 = vrot.lane.b32.xlu0 %v976, 96
    %v1228 = vpop.permute.xlu0 %1227
    %1229 = vrot.lane.b32.xlu0 %v977, 96
    %v1230 = vpop.permute.xlu0 %1229
    %1231 = vrot.lane.b32.xlu0 %v978, 96
    %v1232 = vpop.permute.xlu0 %1231
    %1233 = vrot.lane.b32.xlu0 %v979, 96
    %v1234 = vpop.permute.xlu0 %1233
    %1235 = vrot.lane.b32.xlu0 %v980, 96
    %v1236 = vpop.permute.xlu0 %1235
    %1237 = vrot.lane.b32.xlu0 %v981, 96
    %v1238 = vpop.permute.xlu0 %1237
    %1271 = vrot.lane.b32.xlu0 %v998, 32
    %v1272 = vpop.permute.xlu0 %1271
    %1273 = vrot.lane.b32.xlu0 %v999, 32
    %v1274 = vpop.permute.xlu0 %1273
    %1275 = vrot.lane.b32.xlu0 %v1000, 32
    %v1276 = vpop.permute.xlu0 %1275
    %1277 = vrot.lane.b32.xlu0 %v1001, 32
    %v1278 = vpop.permute.xlu0 %1277
    %1279 = vrot.lane.b32.xlu0 %v1002, 32
    %v1280 = vpop.permute.xlu0 %1279
    %1281 = vrot.lane.b32.xlu0 %v1003, 32
    %v1282 = vpop.permute.xlu0 %1281
    %1283 = vrot.lane.b32.xlu0 %v1004, 32
    %v1284 = vpop.permute.xlu0 %1283
    %1285 = vrot.lane.b32.xlu0 %v1005, 32
    %v1286 = vpop.permute.xlu0 %1285
    %1287 = vrot.lane.b32.xlu0 %v1006, 32
    %v1288 = vpop.permute.xlu0 %1287
    %1289 = vrot.lane.b32.xlu0 %v1007, 32
    %v1290 = vpop.permute.xlu0 %1289
    %1291 = vrot.lane.b32.xlu0 %v1008, 32
    %v1292 = vpop.permute.xlu0 %1291
    %1293 = vrot.lane.b32.xlu0 %v1009, 32
    %v1294 = vpop.permute.xlu0 %1293
    %1295 = vrot.lane.b32.xlu0 %v1010, 32
    %v1296 = vpop.permute.xlu0 %1295
    %1297 = vrot.lane.b32.xlu0 %v1011, 32
    %v1298 = vpop.permute.xlu0 %1297
    %1299 = vrot.lane.b32.xlu0 %v1012, 32
    %v1300 = vpop.permute.xlu0 %1299
    %1301 = vrot.lane.b32.xlu0 %v1013, 32
    %v1302 = vpop.permute.xlu0 %1301
    %1335 = vrot.lane.b32.xlu0 %v1015, 64
    %v1336 = vpop.permute.xlu0 %1335
    %1337 = vrot.lane.b32.xlu0 %v1016, 64
    %v1338 = vpop.permute.xlu0 %1337
    %1339 = vrot.lane.b32.xlu0 %v1017, 64
    %v1340 = vpop.permute.xlu0 %1339
    %1341 = vrot.lane.b32.xlu0 %v1018, 64
    %v1342 = vpop.permute.xlu0 %1341
    %1343 = vrot.lane.b32.xlu0 %v1019, 64
    %v1344 = vpop.permute.xlu0 %1343
    %1345 = vrot.lane.b32.xlu0 %v1020, 64
    %v1346 = vpop.permute.xlu0 %1345
    %1347 = vrot.lane.b32.xlu0 %v1021, 64
    %v1348 = vpop.permute.xlu0 %1347
    %1349 = vrot.lane.b32.xlu0 %v1022, 64
    %v1350 = vpop.permute.xlu0 %1349
    %1351 = vrot.lane.b32.xlu0 %v1023, 64
    %v1352 = vpop.permute.xlu0 %1351
    %1353 = vrot.lane.b32.xlu0 %v1024, 64
    %v1354 = vpop.permute.xlu0 %1353
    %1355 = vrot.lane.b32.xlu0 %v1025, 64
    %v1356 = vpop.permute.xlu0 %1355
    %1357 = vrot.lane.b32.xlu0 %v1026, 64
    %v1358 = vpop.permute.xlu0 %1357
    %1359 = vrot.lane.b32.xlu0 %v1027, 64
    %v1360 = vpop.permute.xlu0 %1359
    %1361 = vrot.lane.b32.xlu0 %v1028, 64
    %v1362 = vpop.permute.xlu0 %1361
    %1363 = vrot.lane.b32.xlu0 %v1029, 64
    %v1364 = vpop.permute.xlu0 %1363
    %1365 = vrot.lane.b32.xlu0 %v1030, 64
    %v1366 = vpop.permute.xlu0 %1365
    %1399 = vrot.lane.b32.xlu0 %v1031, 96
    %v1400 = vpop.permute.xlu0 %1399
    %1401 = vrot.lane.b32.xlu0 %v1032, 96
    %v1402 = vpop.permute.xlu0 %1401
    %1403 = vrot.lane.b32.xlu0 %v1033, 96
    %v1404 = vpop.permute.xlu0 %1403
    %1405 = vrot.lane.b32.xlu0 %v1034, 96
    %v1406 = vpop.permute.xlu0 %1405
    %1407 = vrot.lane.b32.xlu0 %v1035, 96
    %v1408 = vpop.permute.xlu0 %1407
    %1409 = vrot.lane.b32.xlu0 %v1036, 96
    %v1410 = vpop.permute.xlu0 %1409
    %1411 = vrot.lane.b32.xlu0 %v1037, 96
    %v1412 = vpop.permute.xlu0 %1411
    %1413 = vrot.lane.b32.xlu0 %v1038, 96
    %v1414 = vpop.permute.xlu0 %1413
    %1415 = vrot.lane.b32.xlu0 %v1039, 96
    %v1416 = vpop.permute.xlu0 %1415
    %1417 = vrot.lane.b32.xlu0 %v1040, 96
    %v1418 = vpop.permute.xlu0 %1417
    %1419 = vrot.lane.b32.xlu0 %v1041, 96
    %v1420 = vpop.permute.xlu0 %1419
    %1421 = vrot.lane.b32.xlu0 %v1042, 96
    %v1422 = vpop.permute.xlu0 %1421
    %1423 = vrot.lane.b32.xlu0 %v1043, 96
    %v1424 = vpop.permute.xlu0 %1423
    %1425 = vrot.lane.b32.xlu0 %v1044, 96
    %v1426 = vpop.permute.xlu0 %1425
    %1427 = vrot.lane.b32.xlu0 %v1045, 96
    %v1428 = vpop.permute.xlu0 %1427
    %1429 = vrot.lane.b32.xlu0 %v1046, 96
    %v1430 = vpop.permute.xlu0 %1429
    %v1447 = vsel %vm587, %v918, %v1080
    %v1448 = vsel %vm587, %v919, %v1082
    %v1449 = vsel %vm587, %v920, %v1084
    %v1450 = vsel %vm587, %v921, %v1086
    %v1451 = vsel %vm587, %v922, %v1088
    %v1452 = vsel %vm587, %v923, %v1090
    %v1453 = vsel %vm587, %v924, %v1092
    %v1454 = vsel %vm587, %v925, %v1094
    %v1455 = vsel %vm587, %v926, %v1096
    %v1456 = vsel %vm587, %v927, %v1098
    %v1457 = vsel %vm587, %v928, %v1100
    %v1458 = vsel %vm587, %v929, %v1102
    %v1459 = vsel %vm587, %v930, %v1104
    %v1460 = vsel %vm587, %v931, %v1106
    %v1461 = vsel %vm587, %v932, %v1108
    %v1462 = vsel %vm587, %v933, %v1110
    %vm1463 = vcmask 523264
    %v1464 = vsel %vm1463, %v1447, %v1144
    %v1465 = vsel %vm1463, %v1448, %v1146
    %v1466 = vsel %vm1463, %v1449, %v1148
    %v1467 = vsel %vm1463, %v1450, %v1150
    %v1468 = vsel %vm1463, %v1451, %v1152
    %v1469 = vsel %vm1463, %v1452, %v1154
    %v1470 = vsel %vm1463, %v1453, %v1156
    %v1471 = vsel %vm1463, %v1454, %v1158
    %v1472 = vsel %vm1463, %v1455, %v1160
    %v1473 = vsel %vm1463, %v1456, %v1162
    %v1474 = vsel %vm1463, %v1457, %v1164
    %v1475 = vsel %vm1463, %v1458, %v1166
    %v1476 = vsel %vm1463, %v1459, %v1168
    %v1477 = vsel %vm1463, %v1460, %v1170
    %v1478 = vsel %vm1463, %v1461, %v1172
    %v1479 = vsel %vm1463, %v1462, %v1174
    %vm1480 = vcmask 785408
    %v1481 = vsel %vm1480, %v1464, %v1208
    %v1482 = vsel %vm1480, %v1465, %v1210
    %v1483 = vsel %vm1480, %v1466, %v1212
    %v1484 = vsel %vm1480, %v1467, %v1214
    %v1485 = vsel %vm1480, %v1468, %v1216
    %v1486 = vsel %vm1480, %v1469, %v1218
    %v1487 = vsel %vm1480, %v1470, %v1220
    %v1488 = vsel %vm1480, %v1471, %v1222
    %v1489 = vsel %vm1480, %v1472, %v1224
    %v1490 = vsel %vm1480, %v1473, %v1226
    %v1491 = vsel %vm1480, %v1474, %v1228
    %v1492 = vsel %vm1480, %v1475, %v1230
    %v1493 = vsel %vm1480, %v1476, %v1232
    %v1494 = vsel %vm1480, %v1477, %v1234
    %v1495 = vsel %vm1480, %v1478, %v1236
    %v1496 = vsel %vm1480, %v1479, %v1238
    %v1497 = vsel %vm587, %v982, %v1272
    %v1498 = vsel %vm587, %v983, %v1274
    %v1499 = vsel %vm587, %v984, %v1276
    %v1500 = vsel %vm587, %v985, %v1278
    %v1501 = vsel %vm587, %v986, %v1280
    %v1502 = vsel %vm587, %v987, %v1282
    %v1503 = vsel %vm587, %v988, %v1284
    %v1504 = vsel %vm587, %v989, %v1286
    %v1505 = vsel %vm587, %v990, %v1288
    %v1506 = vsel %vm587, %v991, %v1290
    %v1507 = vsel %vm587, %v992, %v1292
    %v1508 = vsel %vm587, %v993, %v1294
    %v1509 = vsel %vm587, %v994, %v1296
    %v1510 = vsel %vm587, %v995, %v1298
    %v1511 = vsel %vm587, %v996, %v1300
    %v1512 = vsel %vm587, %v997, %v1302
    %v1513 = vsel %vm1463, %v1497, %v1336
    %v1514 = vsel %vm1463, %v1498, %v1338
    %v1515 = vsel %vm1463, %v1499, %v1340
    %v1516 = vsel %vm1463, %v1500, %v1342
    %v1517 = vsel %vm1463, %v1501, %v1344
    %v1518 = vsel %vm1463, %v1502, %v1346
    %v1519 = vsel %vm1463, %v1503, %v1348
    %v1520 = vsel %vm1463, %v1504, %v1350
    %v1521 = vsel %vm1463, %v1505, %v1352
    %v1522 = vsel %vm1463, %v1506, %v1354
    %v1523 = vsel %vm1463, %v1507, %v1356
    %v1524 = vsel %vm1463, %v1508, %v1358
    %v1525 = vsel %vm1463, %v1509, %v1360
    %v1526 = vsel %vm1463, %v1510, %v1362
    %v1527 = vsel %vm1463, %v1511, %v1364
    %v1528 = vsel %vm1463, %v1512, %v1366
    %v1529 = vsel %vm1480, %v1513, %v1400
    %v1530 = vsel %vm1480, %v1514, %v1402
    %v1531 = vsel %vm1480, %v1515, %v1404
    %v1532 = vsel %vm1480, %v1516, %v1406
    %v1533 = vsel %vm1480, %v1517, %v1408
    %v1534 = vsel %vm1480, %v1518, %v1410
    %v1535 = vsel %vm1480, %v1519, %v1412
    %v1536 = vsel %vm1480, %v1520, %v1414
    %v1537 = vsel %vm1480, %v1521, %v1416
    %v1538 = vsel %vm1480, %v1522, %v1418
    %v1539 = vsel %vm1480, %v1523, %v1420
    %v1540 = vsel %vm1480, %v1524, %v1422
    %v1541 = vsel %vm1480, %v1525, %v1424
    %v1542 = vsel %vm1480, %v1526, %v1426
    %v1543 = vsel %vm1480, %v1527, %v1428
    %v1544 = vsel %vm1480, %v1528, %v1430
    %v1545 = vld [vmem:[%s3] sm:$0xff]
    %v1546 = vld [vmem:[%s3 + $0x8] sm:$0xff]
    %v1547 = vld [vmem:[%s3 + $0x10] sm:$0xff]
    %v1548 = vld [vmem:[%s3 + $0x18] sm:$0xff]
    %v1549 = vld [vmem:[%s3 + $0x20] sm:$0xff]
    %v1550 = vld [vmem:[%s3 + $0x28] sm:$0xff]
    %v1551 = vld [vmem:[%s3 + $0x30] sm:$0xff]
    %v1552 = vld [vmem:[%s3 + $0x38] sm:$0xff]
    %v1553 = vld [vmem:[%s3 + $0x40] sm:$0xff]
    %v1554 = vld [vmem:[%s3 + $0x48] sm:$0xff]
    %v1555 = vld [vmem:[%s3 + $0x50] sm:$0xff]
    %v1556 = vld [vmem:[%s3 + $0x58] sm:$0xff]
    %v1557 = vld [vmem:[%s3 + $0x60] sm:$0xff]
    %v1558 = vld [vmem:[%s3 + $0x68] sm:$0xff]
    %v1559 = vld [vmem:[%s3 + $0x70] sm:$0xff]
    %v1560 = vld [vmem:[%s3 + $0x78] sm:$0xff]
    %v1561 = vld [vmem:[%s3 + $0x80] sm:$0xff]
    %v1562 = vld [vmem:[%s3 + $0x88] sm:$0xff]
    %v1563 = vld [vmem:[%s3 + $0x90] sm:$0xff]
    %v1564 = vld [vmem:[%s3 + $0x98] sm:$0xff]
    %v1565 = vld [vmem:[%s3 + $0xa0] sm:$0xff]
    %v1566 = vld [vmem:[%s3 + $0xa8] sm:$0xff]
    %v1567 = vld [vmem:[%s3 + $0xb0] sm:$0xff]
    %v1568 = vld [vmem:[%s3 + $0xb8] sm:$0xff]
    %v1569 = vld [vmem:[%s3 + $0xc0] sm:$0xff]
    %v1570 = vld [vmem:[%s3 + $0xc8] sm:$0xff]
    %v1571 = vld [vmem:[%s3 + $0xd0] sm:$0xff]
    %v1572 = vld [vmem:[%s3 + $0xd8] sm:$0xff]
    %v1573 = vld [vmem:[%s3 + $0xe0] sm:$0xff]
    %v1574 = vld [vmem:[%s3 + $0xe8] sm:$0xff]
    %v1575 = vld [vmem:[%s3 + $0xf0] sm:$0xff]
    %v1576 = vld [vmem:[%s3 + $0xf8] sm:$0xff]
    %v1577 = vld [vmem:[%s3 + $0x100] sm:$0xff]
    %v1578 = vld [vmem:[%s3 + $0x108] sm:$0xff]
    %v1579 = vld [vmem:[%s3 + $0x110] sm:$0xff]
    %v1580 = vld [vmem:[%s3 + $0x118] sm:$0xff]
    %v1581 = vld [vmem:[%s4] sm:$0x1]
    %v1583 = vperm.slane %v1581, 0
    %v1586 = vsel %vm587, %v1047, 0
    %v1589 = vsel %vm587, %v1048, 0
    %v1592 = vsel %vm587, %v1049, 0
    %v1595 = vsel %vm587, %v1050, 0
    %v1598 = vsel %vm587, %v1051, 0
    %v1601 = vsel %vm587, %v1052, 0
    %v1604 = vsel %vm587, %v1053, 0
    %v1607 = vsel %vm587, %v1054, 0
    %v1610 = vsel %vm587, %v1055, 0
    %v1613 = vsel %vm587, %v1056, 0
    %v1616 = vsel %vm587, %v1057, 0
    %v1619 = vsel %vm587, %v1058, 0
    %v1622 = vsel %vm587, %v1059, 0
    %v1625 = vsel %vm587, %v1060, 0
    %v1628 = vsel %vm587, %v1061, 0
    %v1631 = vsel %vm587, %v1062, 0
    %1633 = vmatpush.msra.mxu0 %v1560
    %1634 = vmatpush.msra.mxu0 %v1559
    %1635 = vmatpush.msra.mxu0 %v1558
    %1636 = vmatpush.msra.mxu0 %v1557
    %1637 = vmatpush.msra.mxu0 %v1556
    %1638 = vmatpush.msra.mxu0 %v1555
    %1639 = vmatpush.msra.mxu0 %v1554
    %1640 = vmatpush.msra.mxu0 %v1553
    %1641 = vmatpush.msra.mxu0 %v1552
    %1642 = vmatpush.msra.mxu0 %v1551
    %1643 = vmatpush.msra.mxu0 %v1550
    %1644 = vmatpush.msra.mxu0 %v1549
    %1645 = vmatpush.msra.mxu0 %v1548
    %1646 = vmatpush.msra.mxu0 %v1547
    %1647 = vmatpush.msra.mxu0 %v1546
    %1648 = vmatpush.msra.mxu0 %v1545
    %1649 = vmatmul.f32.gmra.mxu0 %v1481
    %v1650 = vpop.f32.mrf.mxu0
    %v1651 = vadd.f32 %v1583, %v1650
    %1652 = vmatmul.f32.gmra.mxu0 %v1482
    %v1653 = vpop.f32.mrf.mxu0
    %v1654 = vadd.f32 %v1583, %v1653
    %1655 = vmatmul.f32.gmra.mxu0 %v1483
    %v1656 = vpop.f32.mrf.mxu0
    %v1657 = vadd.f32 %v1583, %v1656
    %1658 = vmatmul.f32.gmra.mxu0 %v1484
    %v1659 = vpop.f32.mrf.mxu0
    %v1660 = vadd.f32 %v1583, %v1659
    %1661 = vmatmul.f32.gmra.mxu0 %v1485
    %v1662 = vpop.f32.mrf.mxu0
    %v1663 = vadd.f32 %v1583, %v1662
    %1664 = vmatmul.f32.gmra.mxu0 %v1486
    %v1665 = vpop.f32.mrf.mxu0
    %v1666 = vadd.f32 %v1583, %v1665
    %1667 = vmatmul.f32.gmra.mxu0 %v1487
    %v1668 = vpop.f32.mrf.mxu0
    %v1669 = vadd.f32 %v1583, %v1668
    %1670 = vmatmul.f32.gmra.mxu0 %v1488
    %v1671 = vpop.f32.mrf.mxu0
    %v1672 = vadd.f32 %v1583, %v1671
    %1673 = vmatmul.f32.gmra.mxu0 %v1489
    %v1674 = vpop.f32.mrf.mxu0
    %v1675 = vadd.f32 %v1583, %v1674
    %1676 = vmatmul.f32.gmra.mxu0 %v1490
    %v1677 = vpop.f32.mrf.mxu0
    %v1678 = vadd.f32 %v1583, %v1677
    %1679 = vmatmul.f32.gmra.mxu0 %v1491
    %v1680 = vpop.f32.mrf.mxu0
    %v1681 = vadd.f32 %v1583, %v1680
    %1682 = vmatmul.f32.gmra.mxu0 %v1492
    %v1683 = vpop.f32.mrf.mxu0
    %v1684 = vadd.f32 %v1583, %v1683
    %1685 = vmatmul.f32.gmra.mxu0 %v1493
    %v1686 = vpop.f32.mrf.mxu0
    %v1687 = vadd.f32 %v1583, %v1686
    %1688 = vmatmul.f32.gmra.mxu0 %v1494
    %v1689 = vpop.f32.mrf.mxu0
    %v1690 = vadd.f32 %v1583, %v1689
    %1691 = vmatmul.f32.gmra.mxu0 %v1495
    %v1692 = vpop.f32.mrf.mxu0
    %v1693 = vadd.f32 %v1583, %v1692
    %1694 = vmatmul.f32.gmra.mxu0 %v1496
    %v1695 = vpop.f32.mrf.mxu0
    %v1696 = vadd.f32 %v1583, %v1695
    %1697 = vdwg.mxu0
    %1698 = vmatpush.msra.mxu0 %v1576
    %1699 = vmatpush.msra.mxu0 %v1575
    %1700 = vmatpush.msra.mxu0 %v1574
    %1701 = vmatpush.msra.mxu0 %v1573
    %1702 = vmatpush.msra.mxu0 %v1572
    %1703 = vmatpush.msra.mxu0 %v1571
    %1704 = vmatpush.msra.mxu0 %v1570
    %1705 = vmatpush.msra.mxu0 %v1569
    %1706 = vmatpush.msra.mxu0 %v1568
    %1707 = vmatpush.msra.mxu0 %v1567
    %1708 = vmatpush.msra.mxu0 %v1566
    %1709 = vmatpush.msra.mxu0 %v1565
    %1710 = vmatpush.msra.mxu0 %v1564
    %1711 = vmatpush.msra.mxu0 %v1563
    %1712 = vmatpush.msra.mxu0 %v1562
    %1713 = vmatpush.msra.mxu0 %v1561
    %1714 = vmatmul.f32.gmra.mxu0 %v1529
    %v1715 = vpop.f32.mrf.mxu0
    %v1716 = vadd.f32 %v1651, %v1715
    %1717 = vmatmul.f32.gmra.mxu0 %v1530
    %v1718 = vpop.f32.mrf.mxu0
    %v1719 = vadd.f32 %v1654, %v1718
    %1720 = vmatmul.f32.gmra.mxu0 %v1531
    %v1721 = vpop.f32.mrf.mxu0
    %v1722 = vadd.f32 %v1657, %v1721
    %1723 = vmatmul.f32.gmra.mxu0 %v1532
    %v1724 = vpop.f32.mrf.mxu0
    %v1725 = vadd.f32 %v1660, %v1724
    %1726 = vmatmul.f32.gmra.mxu0 %v1533
    %v1727 = vpop.f32.mrf.mxu0
    %v1728 = vadd.f32 %v1663, %v1727
    %1729 = vmatmul.f32.gmra.mxu0 %v1534
    %v1730 = vpop.f32.mrf.mxu0
    %v1731 = vadd.f32 %v1666, %v1730
    %1732 = vmatmul.f32.gmra.mxu0 %v1535
    %v1733 = vpop.f32.mrf.mxu0
    %v1734 = vadd.f32 %v1669, %v1733
    %1735 = vmatmul.f32.gmra.mxu0 %v1536
    %v1736 = vpop.f32.mrf.mxu0
    %v1737 = vadd.f32 %v1672, %v1736
    %1738 = vmatmul.f32.gmra.mxu0 %v1537
    %v1739 = vpop.f32.mrf.mxu0
    %v1740 = vadd.f32 %v1675, %v1739
    %1741 = vmatmul.f32.gmra.mxu0 %v1538
    %v1742 = vpop.f32.mrf.mxu0
    %v1743 = vadd.f32 %v1678, %v1742
    %1744 = vmatmul.f32.gmra.mxu0 %v1539
    %v1745 = vpop.f32.mrf.mxu0
    %v1746 = vadd.f32 %v1681, %v1745
    %1747 = vmatmul.f32.gmra.mxu0 %v1540
    %v1748 = vpop.f32.mrf.mxu0
    %v1749 = vadd.f32 %v1684, %v1748
    %1750 = vmatmul.f32.gmra.mxu0 %v1541
    %v1751 = vpop.f32.mrf.mxu0
    %v1752 = vadd.f32 %v1687, %v1751
    %1753 = vmatmul.f32.gmra.mxu0 %v1542
    %v1754 = vpop.f32.mrf.mxu0
    %v1755 = vadd.f32 %v1690, %v1754
    %1756 = vmatmul.f32.gmra.mxu0 %v1543
    %v1757 = vpop.f32.mrf.mxu0
    %v1758 = vadd.f32 %v1693, %v1757
    %1759 = vmatmul.f32.gmra.mxu0 %v1544
    %v1760 = vpop.f32.mrf.mxu0
    %v1761 = vadd.f32 %v1696, %v1760
    %1762 = vdwg.mxu0
    %1763 = vmatpush.msra.mxu0 0.0
    %1764 = vmatpush.msra.mxu0 0.0
    %1765 = vmatpush.msra.mxu0 0.0
    %1766 = vmatpush.msra.mxu0 0.0
    %1767 = vmatpush.msra.mxu0 0.0
    %1768 = vmatpush.msra.mxu0 0.0
    %1769 = vmatpush.msra.mxu0 0.0
    %1770 = vmatpush.msra.mxu0 0.0
    %1771 = vmatpush.msra.mxu0 0.0
    %1772 = vmatpush.msra.mxu0 0.0
    %1773 = vmatpush.msra.mxu0 0.0
    %1774 = vmatpush.msra.mxu0 0.0
    %1775 = vmatpush.msra.mxu0 %v1580
    %1776 = vmatpush.msra.mxu0 %v1579
    %1777 = vmatpush.msra.mxu0 %v1578
    %1778 = vmatpush.msra.mxu0 %v1577
    %1779 = vmatmul.f32.gmra.mxu0 %v1586
    %v1780 = vpop.f32.mrf.mxu0
    %v1781 = vadd.f32 %v1716, %v1780
    %1782 = vmatmul.f32.gmra.mxu0 %v1589
    %v1783 = vpop.f32.mrf.mxu0
    %v1784 = vadd.f32 %v1719, %v1783
    %1785 = vmatmul.f32.gmra.mxu0 %v1592
    %v1786 = vpop.f32.mrf.mxu0
    %v1787 = vadd.f32 %v1722, %v1786
    %1788 = vmatmul.f32.gmra.mxu0 %v1595
    %v1789 = vpop.f32.mrf.mxu0
    %v1790 = vadd.f32 %v1725, %v1789
    %1791 = vmatmul.f32.gmra.mxu0 %v1598
    %v1792 = vpop.f32.mrf.mxu0
    %v1793 = vadd.f32 %v1728, %v1792
    %1794 = vmatmul.f32.gmra.mxu0 %v1601
    %v1795 = vpop.f32.mrf.mxu0
    %v1796 = vadd.f32 %v1731, %v1795
    %1797 = vmatmul.f32.gmra.mxu0 %v1604
    %v1798 = vpop.f32.mrf.mxu0
    %v1799 = vadd.f32 %v1734, %v1798
    %1800 = vmatmul.f32.gmra.mxu0 %v1607
    %v1801 = vpop.f32.mrf.mxu0
    %v1802 = vadd.f32 %v1737, %v1801
    %1803 = vmatmul.f32.gmra.mxu0 %v1610
    %v1804 = vpop.f32.mrf.mxu0
    %v1805 = vadd.f32 %v1740, %v1804
    %1806 = vmatmul.f32.gmra.mxu0 %v1613
    %v1807 = vpop.f32.mrf.mxu0
    %v1808 = vadd.f32 %v1743, %v1807
    %1809 = vmatmul.f32.gmra.mxu0 %v1616
    %v1810 = vpop.f32.mrf.mxu0
    %v1811 = vadd.f32 %v1746, %v1810
    %1812 = vmatmul.f32.gmra.mxu0 %v1619
    %v1813 = vpop.f32.mrf.mxu0
    %v1814 = vadd.f32 %v1749, %v1813
    %1815 = vmatmul.f32.gmra.mxu0 %v1622
    %v1816 = vpop.f32.mrf.mxu0
    %v1817 = vadd.f32 %v1752, %v1816
    %1818 = vmatmul.f32.gmra.mxu0 %v1625
    %v1819 = vpop.f32.mrf.mxu0
    %v1820 = vadd.f32 %v1755, %v1819
    %1821 = vmatmul.f32.gmra.mxu0 %v1628
    %v1822 = vpop.f32.mrf.mxu0
    %v1823 = vadd.f32 %v1758, %v1822
    %1824 = vmatmul.f32.gmra.mxu0 %v1631
    %v1825 = vpop.f32.mrf.mxu0
    %v1826 = vadd.f32 %v1761, %v1825
    %1827 = vdwg.mxu0
    %v1828 = vmax.f32 %v1781, 0.0
    %v1829 = vmax.f32 %v1784, 0.0
    %v1830 = vmax.f32 %v1787, 0.0
    %v1831 = vmax.f32 %v1790, 0.0
    %v1832 = vmax.f32 %v1793, 0.0
    %v1833 = vmax.f32 %v1796, 0.0
    %v1834 = vmax.f32 %v1799, 0.0
    %v1835 = vmax.f32 %v1802, 0.0
    %v1836 = vmax.f32 %v1805, 0.0
    %v1837 = vmax.f32 %v1808, 0.0
    %v1838 = vmax.f32 %v1811, 0.0
    %v1839 = vmax.f32 %v1814, 0.0
    %v1840 = vmax.f32 %v1817, 0.0
    %v1841 = vmax.f32 %v1820, 0.0
    %v1842 = vmax.f32 %v1823, 0.0
    %v1843 = vmax.f32 %v1826, 0.0
    %1844 = vst.msk [vmem:[#allocation5] sm:$0xff] %vm1463, %v1828
    %1845 = vst.msk [vmem:[#allocation5 + $0x8] sm:$0xff] %vm1463, %v1829
    %1846 = vst.msk [vmem:[#allocation5 + $0x10] sm:$0xff] %vm1463, %v1830
    %1847 = vst.msk [vmem:[#allocation5 + $0x18] sm:$0xff] %vm1463, %v1831
    %1848 = vst.msk [vmem:[#allocation5 + $0x20] sm:$0xff] %vm1463, %v1832
    %1849 = vst.msk [vmem:[#allocation5 + $0x28] sm:$0xff] %vm1463, %v1833
    %1850 = vst.msk [vmem:[#allocation5 + $0x30] sm:$0xff] %vm1463, %v1834
    %1851 = vst.msk [vmem:[#allocation5 + $0x38] sm:$0xff] %vm1463, %v1835
    %1852 = vst.msk [vmem:[#allocation5 + $0x40] sm:$0xff] %vm1463, %v1836
    %1853 = vst.msk [vmem:[#allocation5 + $0x48] sm:$0xff] %vm1463, %v1837
    %1854 = vst.msk [vmem:[#allocation5 + $0x50] sm:$0xff] %vm1463, %v1838
    %1855 = vst.msk [vmem:[#allocation5 + $0x58] sm:$0xff] %vm1463, %v1839
    %1856 = vst.msk [vmem:[#allocation5 + $0x60] sm:$0xff] %vm1463, %v1840
    %1857 = vst.msk [vmem:[#allocation5 + $0x68] sm:$0xff] %vm1463, %v1841
    %1858 = vst.msk [vmem:[#allocation5 + $0x70] sm:$0xff] %vm1463, %v1842
    %1859 = vst.msk [vmem:[#allocation5 + $0x78] sm:$0xff] %vm1463, %v1843
    %v1860 = vld [vmem:[#allocation5] sm:$0xff]
    %v1861 = vld [vmem:[#allocation5 + $0x10] sm:$0xff]
    %v1862 = vld [vmem:[#allocation5 + $0x20] sm:$0xff]
    %v1863 = vld [vmem:[#allocation5 + $0x30] sm:$0xff]
    %v1864 = vld [vmem:[#allocation5 + $0x40] sm:$0xff]
    %v1865 = vld [vmem:[#allocation5 + $0x50] sm:$0xff]
    %v1866 = vld [vmem:[#allocation5 + $0x60] sm:$0xff]
    %v1867 = vld [vmem:[#allocation5 + $0x70] sm:$0xff]
    %s1868 = scalar_lea.vmem [#allocation5], 8
    %v1869 = vld [vmem:[%s1868] sm:$0xff]
    %v1870 = vld [vmem:[%s1868 + $0x10] sm:$0xff]
    %v1871 = vld [vmem:[%s1868 + $0x20] sm:$0xff]
    %v1872 = vld [vmem:[%s1868 + $0x30] sm:$0xff]
    %v1873 = vld [vmem:[%s1868 + $0x40] sm:$0xff]
    %v1874 = vld [vmem:[%s1868 + $0x50] sm:$0xff]
    %v1875 = vld [vmem:[%s1868 + $0x60] sm:$0xff]
    %v1876 = vld [vmem:[%s1868 + $0x70] sm:$0xff]
    %v1877 = vmax.f32 %v1860, %v1869
    %v1878 = vmax.f32 %v1861, %v1870
    %v1879 = vmax.f32 %v1862, %v1871
    %v1880 = vmax.f32 %v1863, %v1872
    %v1881 = vmax.f32 %v1864, %v1873
    %v1882 = vmax.f32 %v1865, %v1874
    %v1883 = vmax.f32 %v1866, %v1875
    %v1884 = vmax.f32 %v1867, %v1876
    %1885 = vst.msk [vmem:[#allocation6] sm:$0xff] %vm1463, %v1877
    %1886 = vst.msk [vmem:[#allocation6 + $0x8] sm:$0xff] %vm1463, %v1878
    %1887 = vst.msk [vmem:[#allocation6 + $0x10] sm:$0xff] %vm1463, %v1879
    %1888 = vst.msk [vmem:[#allocation6 + $0x18] sm:$0xff] %vm1463, %v1880
    %1889 = vst.msk [vmem:[#allocation6 + $0x20] sm:$0xff] %vm1463, %v1881
    %1890 = vst.msk [vmem:[#allocation6 + $0x28] sm:$0xff] %vm1463, %v1882
    %1891 = vst.msk [vmem:[#allocation6 + $0x30] sm:$0xff] %vm1463, %v1883
    %1892 = vst.msk [vmem:[#allocation6 + $0x38] sm:$0xff] %vm1463, %v1884
    %v1893 = vld [vmem:[#allocation6] sm:$0x1]
    %v1894 = vld [vmem:[#allocation6 + $0x20] sm:$0x1]
    %v1895 = vld [vmem:[#allocation6 + $0x1] sm:$0x1]
    %v1896 = vld [vmem:[#allocation6 + $0x21] sm:$0x1]
    %v1897 = vmax.f32 %v1893, %v1895
    %v1898 = vmax.f32 %v1894, %v1896
    %v1899 = vld [vmem:[#allocation6 + $0x2] sm:$0x1]
    %v1900 = vld [vmem:[#allocation6 + $0x22] sm:$0x1]
    %v1901 = vld [vmem:[#allocation6 + $0x3] sm:$0x1]
    %v1902 = vld [vmem:[#allocation6 + $0x23] sm:$0x1]
    %v1903 = vmax.f32 %v1899, %v1901
    %v1904 = vmax.f32 %v1900, %v1902
    %v1905 = vld [vmem:[#allocation6 + $0x4] sm:$0x1]
    %v1906 = vld [vmem:[#allocation6 + $0x24] sm:$0x1]
    %v1907 = vld [vmem:[#allocation6 + $0x5] sm:$0x1]
    %v1908 = vld [vmem:[#allocation6 + $0x25] sm:$0x1]
    %v1909 = vmax.f32 %v1905, %v1907
    %v1910 = vmax.f32 %v1906, %v1908
    %v1911 = vld [vmem:[#allocation6 + $0x6] sm:$0x1]
    %v1912 = vld [vmem:[#allocation6 + $0x26] sm:$0x1]
    %v1913 = vld [vmem:[#allocation6 + $0x7] sm:$0x1]
    %v1914 = vld [vmem:[#allocation6 + $0x27] sm:$0x1]
    %v1915 = vmax.f32 %v1911, %v1913
    %v1916 = vmax.f32 %v1912, %v1914
    %s1917 = scalar_lea.vmem [#allocation6], 8
    %v1918 = vld [vmem:[%s1917] sm:$0x1]
    %v1919 = vld [vmem:[%s1917 + $0x20] sm:$0x1]
    %v1920 = vld [vmem:[%s1917 + $0x1] sm:$0x1]
    %v1921 = vld [vmem:[%s1917 + $0x21] sm:$0x1]
    %v1922 = vmax.f32 %v1918, %v1920
    %v1923 = vmax.f32 %v1919, %v1921
    %v1924 = vld [vmem:[%s1917 + $0x2] sm:$0x1]
    %v1925 = vld [vmem:[%s1917 + $0x22] sm:$0x1]
    %v1926 = vld [vmem:[%s1917 + $0x3] sm:$0x1]
    %v1927 = vld [vmem:[%s1917 + $0x23] sm:$0x1]
    %v1928 = vmax.f32 %v1924, %v1926
    %v1929 = vmax.f32 %v1925, %v1927
    %v1930 = vld [vmem:[%s1917 + $0x4] sm:$0x1]
    %v1931 = vld [vmem:[%s1917 + $0x24] sm:$0x1]
    %v1932 = vld [vmem:[%s1917 + $0x5] sm:$0x1]
    %v1933 = vld [vmem:[%s1917 + $0x25] sm:$0x1]
    %v1934 = vmax.f32 %v1930, %v1932
    %v1935 = vmax.f32 %v1931, %v1933
    %v1936 = vld [vmem:[%s1917 + $0x6] sm:$0x1]
    %v1937 = vld [vmem:[%s1917 + $0x26] sm:$0x1]
    %v1938 = vld [vmem:[%s1917 + $0x7] sm:$0x1]
    %v1939 = vld [vmem:[%s1917 + $0x27] sm:$0x1]
    %v1940 = vmax.f32 %v1936, %v1938
    %v1941 = vmax.f32 %v1937, %v1939
    %s1942 = scalar_lea.vmem [#allocation6], 16
    %v1943 = vld [vmem:[%s1942] sm:$0x1]
    %v1944 = vld [vmem:[%s1942 + $0x20] sm:$0x1]
    %v1945 = vld [vmem:[%s1942 + $0x1] sm:$0x1]
    %v1946 = vld [vmem:[%s1942 + $0x21] sm:$0x1]
    %v1947 = vmax.f32 %v1943, %v1945
    %v1948 = vmax.f32 %v1944, %v1946
    %v1949 = vld [vmem:[%s1942 + $0x2] sm:$0x1]
    %v1950 = vld [vmem:[%s1942 + $0x22] sm:$0x1]
    %v1951 = vld [vmem:[%s1942 + $0x3] sm:$0x1]
    %v1952 = vld [vmem:[%s1942 + $0x23] sm:$0x1]
    %v1953 = vmax.f32 %v1949, %v1951
    %v1954 = vmax.f32 %v1950, %v1952
    %v1955 = vld [vmem:[%s1942 + $0x4] sm:$0x1]
    %v1956 = vld [vmem:[%s1942 + $0x24] sm:$0x1]
    %v1957 = vld [vmem:[%s1942 + $0x5] sm:$0x1]
    %v1958 = vld [vmem:[%s1942 + $0x25] sm:$0x1]
    %v1959 = vmax.f32 %v1955, %v1957
    %v1960 = vmax.f32 %v1956, %v1958
    %v1961 = vld [vmem:[%s1942 + $0x6] sm:$0x1]
    %v1962 = vld [vmem:[%s1942 + $0x26] sm:$0x1]
    %v1963 = vld [vmem:[%s1942 + $0x7] sm:$0x1]
    %v1964 = vld [vmem:[%s1942 + $0x27] sm:$0x1]
    %v1965 = vmax.f32 %v1961, %v1963
    %v1966 = vmax.f32 %v1962, %v1964
    %s1967 = scalar_lea.vmem [#allocation6], 24
    %v1968 = vld [vmem:[%s1967] sm:$0x1]
    %v1969 = vld [vmem:[%s1967 + $0x20] sm:$0x1]
    %v1970 = vld [vmem:[%s1967 + $0x1] sm:$0x1]
    %v1971 = vld [vmem:[%s1967 + $0x21] sm:$0x1]
    %v1972 = vmax.f32 %v1968, %v1970
    %v1973 = vmax.f32 %v1969, %v1971
    %v1974 = vld [vmem:[%s1967 + $0x2] sm:$0x1]
    %v1975 = vld [vmem:[%s1967 + $0x22] sm:$0x1]
    %v1976 = vld [vmem:[%s1967 + $0x3] sm:$0x1]
    %v1977 = vld [vmem:[%s1967 + $0x23] sm:$0x1]
    %v1978 = vmax.f32 %v1974, %v1976
    %v1979 = vmax.f32 %v1975, %v1977
    %v1980 = vld [vmem:[%s1967 + $0x4] sm:$0x1]
    %v1981 = vld [vmem:[%s1967 + $0x24] sm:$0x1]
    %v1982 = vld [vmem:[%s1967 + $0x5] sm:$0x1]
    %v1983 = vld [vmem:[%s1967 + $0x25] sm:$0x1]
    %v1984 = vmax.f32 %v1980, %v1982
    %v1985 = vmax.f32 %v1981, %v1983
    %v1986 = vld [vmem:[%s1967 + $0x6] sm:$0x1]
    %v1987 = vld [vmem:[%s1967 + $0x26] sm:$0x1]
    %v1988 = vld [vmem:[%s1967 + $0x7] sm:$0x1]
    %v1989 = vld [vmem:[%s1967 + $0x27] sm:$0x1]
    %v1990 = vmax.f32 %v1986, %v1988
    %v1991 = vmax.f32 %v1987, %v1989
    %v1994 = vrot.slane %v1898, 7
    %vm1995 = vcmask 1041409
    %v1996 = vsel %vm1995, %v1994, %v1897
    %v2000 = vrot.slane %v1904, 7
    %v2001 = vsel %vm1995, %v2000, %v1903
    %2002 = vrot.lane.b32.xlu0 %v2001, 64
    %v2003 = vpop.permute.xlu0 %2002
    %v2007 = vrot.slane %v1910, 7
    %v2008 = vsel %vm1995, %v2007, %v1909
    %v2012 = vrot.slane %v1916, 7
    %v2013 = vsel %vm1995, %v2012, %v1915
    %2014 = vrot.lane.b32.xlu0 %v2013, 64
    %v2015 = vpop.permute.xlu0 %2014
    %v2019 = vrot.slane %v1923, 7
    %v2020 = vsel %vm1995, %v2019, %v1922
    %v2024 = vrot.slane %v1929, 7
    %v2025 = vsel %vm1995, %v2024, %v1928
    %2026 = vrot.lane.b32.xlu0 %v2025, 64
    %v2027 = vpop.permute.xlu0 %2026
    %v2031 = vrot.slane %v1935, 7
    %v2032 = vsel %vm1995, %v2031, %v1934
    %v2036 = vrot.slane %v1941, 7
    %v2037 = vsel %vm1995, %v2036, %v1940
    %2038 = vrot.lane.b32.xlu0 %v2037, 64
    %v2039 = vpop.permute.xlu0 %2038
    %v2043 = vrot.slane %v1948, 7
    %v2044 = vsel %vm1995, %v2043, %v1947
    %v2048 = vrot.slane %v1954, 7
    %v2049 = vsel %vm1995, %v2048, %v1953
    %2050 = vrot.lane.b32.xlu0 %v2049, 64
    %v2051 = vpop.permute.xlu0 %2050
    %v2055 = vrot.slane %v1960, 7
    %v2056 = vsel %vm1995, %v2055, %v1959
    %v2060 = vrot.slane %v1966, 7
    %v2061 = vsel %vm1995, %v2060, %v1965
    %2062 = vrot.lane.b32.xlu0 %v2061, 64
    %v2063 = vpop.permute.xlu0 %2062
    %v2067 = vrot.slane %v1973, 7
    %v2068 = vsel %vm1995, %v2067, %v1972
    %v2072 = vrot.slane %v1979, 7
    %v2073 = vsel %vm1995, %v2072, %v1978
    %2074 = vrot.lane.b32.xlu0 %v2073, 64
    %v2075 = vpop.permute.xlu0 %2074
    %v2079 = vrot.slane %v1985, 7
    %v2080 = vsel %vm1995, %v2079, %v1984
    %v2084 = vrot.slane %v1991, 7
    %v2085 = vsel %vm1995, %v2084, %v1990
    %2086 = vrot.lane.b32.xlu0 %v2085, 64
    %v2087 = vpop.permute.xlu0 %2086
    %v2089 = vsel %vm1463, %v1996, %v2003
    %v2090 = vsel %vm1463, %v2008, %v2015
    %v2091 = vsel %vm1463, %v2020, %v2027
    %v2092 = vsel %vm1463, %v2032, %v2039
    %v2093 = vsel %vm1463, %v2044, %v2051
    %v2094 = vsel %vm1463, %v2056, %v2063
    %v2095 = vsel %vm1463, %v2068, %v2075
    %v2096 = vsel %vm1463, %v2080, %v2087
    %v2097 = vld [vmem:[%s5] sm:$0xff]
    %v2098 = vld [vmem:[%s5 + $0x8] sm:$0xff]
    %v2099 = vld [vmem:[%s5 + $0x10] sm:$0xff]
    %v2100 = vld [vmem:[%s5 + $0x18] sm:$0xff]
    %v2101 = vld [vmem:[%s5 + $0x20] sm:$0xff]
    %v2102 = vld [vmem:[%s5 + $0x28] sm:$0xff]
    %v2103 = vld [vmem:[%s5 + $0x30] sm:$0xff]
    %v2104 = vld [vmem:[%s5 + $0x38] sm:$0xff]
    %v2105 = vld [vmem:[%s5 + $0x40] sm:$0xff]
    %v2106 = vld [vmem:[%s5 + $0x48] sm:$0xff]
    %v2107 = vld [vmem:[%s5 + $0x50] sm:$0xff]
    %v2108 = vld [vmem:[%s5 + $0x58] sm:$0xff]
    %v2109 = vld [vmem:[%s5 + $0x60] sm:$0xff]
    %v2110 = vld [vmem:[%s5 + $0x68] sm:$0xff]
    %v2111 = vld [vmem:[%s5 + $0x70] sm:$0xff]
    %v2112 = vld [vmem:[%s5 + $0x78] sm:$0xff]
    %v2113 = vld [vmem:[%s5 + $0x80] sm:$0xff]
    %v2114 = vld [vmem:[%s5 + $0x88] sm:$0xff]
    %v2115 = vld [vmem:[%s5 + $0x90] sm:$0xff]
    %v2116 = vld [vmem:[%s5 + $0x98] sm:$0xff]
    %v2117 = vld [vmem:[%s5 + $0xa0] sm:$0xff]
    %v2118 = vld [vmem:[%s5 + $0xa8] sm:$0xff]
    %v2119 = vld [vmem:[%s5 + $0xb0] sm:$0xff]
    %v2120 = vld [vmem:[%s5 + $0xb8] sm:$0xff]
    %v2121 = vld [vmem:[%s5 + $0xc0] sm:$0xff]
    %v2122 = vld [vmem:[%s5 + $0xc8] sm:$0xff]
    %v2123 = vld [vmem:[%s5 + $0xd0] sm:$0xff]
    %v2124 = vld [vmem:[%s5 + $0xd8] sm:$0xff]
    %v2125 = vld [vmem:[%s5 + $0xe0] sm:$0xff]
    %v2126 = vld [vmem:[%s5 + $0xe8] sm:$0xff]
    %v2127 = vld [vmem:[%s5 + $0xf0] sm:$0xff]
    %v2128 = vld [vmem:[%s5 + $0xf8] sm:$0xff]
    %v2129 = vld [vmem:[%s5 + $0x100] sm:$0xff]
    %v2130 = vld [vmem:[%s5 + $0x108] sm:$0xff]
    %v2131 = vld [vmem:[%s5 + $0x110] sm:$0xff]
    %v2132 = vld [vmem:[%s5 + $0x118] sm:$0xff]
    %v2133 = vld [vmem:[%s5 + $0x120] sm:$0xff]
    %v2134 = vld [vmem:[%s5 + $0x128] sm:$0xff]
    %v2135 = vld [vmem:[%s5 + $0x130] sm:$0xff]
    %v2136 = vld [vmem:[%s5 + $0x138] sm:$0xff]
    %v2137 = vld [vmem:[%s5 + $0x140] sm:$0xff]
    %v2138 = vld [vmem:[%s5 + $0x148] sm:$0xff]
    %v2139 = vld [vmem:[%s5 + $0x150] sm:$0xff]
    %v2140 = vld [vmem:[%s5 + $0x158] sm:$0xff]
    %v2141 = vld [vmem:[%s5 + $0x160] sm:$0xff]
    %v2142 = vld [vmem:[%s5 + $0x168] sm:$0xff]
    %v2143 = vld [vmem:[%s5 + $0x170] sm:$0xff]
    %v2144 = vld [vmem:[%s5 + $0x178] sm:$0xff]
    %v2145 = vld [vmem:[%s5 + $0x180] sm:$0xff]
    %v2146 = vld [vmem:[%s5 + $0x188] sm:$0xff]
    %v2147 = vld [vmem:[%s5 + $0x190] sm:$0xff]
    %v2148 = vld [vmem:[%s5 + $0x198] sm:$0xff]
    %v2149 = vld [vmem:[%s5 + $0x1a0] sm:$0xff]
    %v2150 = vld [vmem:[%s5 + $0x1a8] sm:$0xff]
    %v2151 = vld [vmem:[%s5 + $0x1b0] sm:$0xff]
    %v2152 = vld [vmem:[%s5 + $0x1b8] sm:$0xff]
    %v2153 = vld [vmem:[%s5 + $0x1c0] sm:$0xff]
    %v2154 = vld [vmem:[%s5 + $0x1c8] sm:$0xff]
    %v2155 = vld [vmem:[%s5 + $0x1d0] sm:$0xff]
    %v2156 = vld [vmem:[%s5 + $0x1d8] sm:$0xff]
    %v2157 = vld [vmem:[%s5 + $0x1e0] sm:$0xff]
    %v2158 = vld [vmem:[%s5 + $0x1e8] sm:$0xff]
    %v2159 = vld [vmem:[%s5 + $0x1f0] sm:$0xff]
    %v2160 = vld [vmem:[%s5 + $0x1f8] sm:$0xff]
    %v2161 = vld [vmem:[%s5 + $0x200] sm:$0xff]
    %v2162 = vld [vmem:[%s5 + $0x208] sm:$0xff]
    %v2163 = vld [vmem:[%s5 + $0x210] sm:$0xff]
    %v2164 = vld [vmem:[%s5 + $0x218] sm:$0xff]
    %v2165 = vld [vmem:[%s5 + $0x220] sm:$0xff]
    %v2166 = vld [vmem:[%s5 + $0x228] sm:$0xff]
    %v2167 = vld [vmem:[%s5 + $0x230] sm:$0xff]
    %v2168 = vld [vmem:[%s5 + $0x238] sm:$0xff]
    %v2169 = vld [vmem:[%s5 + $0x240] sm:$0xff]
    %v2170 = vld [vmem:[%s5 + $0x248] sm:$0xff]
    %v2171 = vld [vmem:[%s5 + $0x250] sm:$0xff]
    %v2172 = vld [vmem:[%s5 + $0x258] sm:$0xff]
    %v2173 = vld [vmem:[%s5 + $0x260] sm:$0xff]
    %v2174 = vld [vmem:[%s5 + $0x268] sm:$0xff]
    %v2175 = vld [vmem:[%s5 + $0x270] sm:$0xff]
    %v2176 = vld [vmem:[%s5 + $0x278] sm:$0xff]
    %v2177 = vld [vmem:[%s5 + $0x280] sm:$0xff]
    %v2178 = vld [vmem:[%s5 + $0x288] sm:$0xff]
    %v2179 = vld [vmem:[%s5 + $0x290] sm:$0xff]
    %v2180 = vld [vmem:[%s5 + $0x298] sm:$0xff]
    %v2181 = vld [vmem:[%s5 + $0x2a0] sm:$0xff]
    %v2182 = vld [vmem:[%s5 + $0x2a8] sm:$0xff]
    %v2183 = vld [vmem:[%s5 + $0x2b0] sm:$0xff]
    %v2184 = vld [vmem:[%s5 + $0x2b8] sm:$0xff]
    %v2185 = vld [vmem:[%s5 + $0x2c0] sm:$0xff]
    %v2186 = vld [vmem:[%s5 + $0x2c8] sm:$0xff]
    %v2187 = vld [vmem:[%s5 + $0x2d0] sm:$0xff]
    %v2188 = vld [vmem:[%s5 + $0x2d8] sm:$0xff]
    %v2189 = vld [vmem:[%s5 + $0x2e0] sm:$0xff]
    %v2190 = vld [vmem:[%s5 + $0x2e8] sm:$0xff]
    %v2191 = vld [vmem:[%s5 + $0x2f0] sm:$0xff]
    %v2192 = vld [vmem:[%s5 + $0x2f8] sm:$0xff]
    %v2193 = vld [vmem:[%s5 + $0x300] sm:$0xff]
    %v2194 = vld [vmem:[%s5 + $0x308] sm:$0xff]
    %v2195 = vld [vmem:[%s5 + $0x310] sm:$0xff]
    %v2196 = vld [vmem:[%s5 + $0x318] sm:$0xff]
    %v2197 = vld [vmem:[%s5 + $0x320] sm:$0xff]
    %v2198 = vld [vmem:[%s5 + $0x328] sm:$0xff]
    %v2199 = vld [vmem:[%s5 + $0x330] sm:$0xff]
    %v2200 = vld [vmem:[%s5 + $0x338] sm:$0xff]
    %v2201 = vld [vmem:[%s5 + $0x340] sm:$0xff]
    %v2202 = vld [vmem:[%s5 + $0x348] sm:$0xff]
    %v2203 = vld [vmem:[%s5 + $0x350] sm:$0xff]
    %v2204 = vld [vmem:[%s5 + $0x358] sm:$0xff]
    %v2205 = vld [vmem:[%s5 + $0x360] sm:$0xff]
    %v2206 = vld [vmem:[%s5 + $0x368] sm:$0xff]
    %v2207 = vld [vmem:[%s5 + $0x370] sm:$0xff]
    %v2208 = vld [vmem:[%s5 + $0x378] sm:$0xff]
    %v2209 = vld [vmem:[%s5 + $0x380] sm:$0xff]
    %v2210 = vld [vmem:[%s5 + $0x388] sm:$0xff]
    %v2211 = vld [vmem:[%s5 + $0x390] sm:$0xff]
    %v2212 = vld [vmem:[%s5 + $0x398] sm:$0xff]
    %v2213 = vld [vmem:[%s5 + $0x3a0] sm:$0xff]
    %v2214 = vld [vmem:[%s5 + $0x3a8] sm:$0xff]
    %v2215 = vld [vmem:[%s5 + $0x3b0] sm:$0xff]
    %v2216 = vld [vmem:[%s5 + $0x3b8] sm:$0xff]
    %v2217 = vld [vmem:[%s5 + $0x3c0] sm:$0xff]
    %v2218 = vld [vmem:[%s5 + $0x3c8] sm:$0xff]
    %v2219 = vld [vmem:[%s5 + $0x3d0] sm:$0xff]
    %v2220 = vld [vmem:[%s5 + $0x3d8] sm:$0xff]
    %v2221 = vld [vmem:[%s5 + $0x3e0] sm:$0xff]
    %v2222 = vld [vmem:[%s5 + $0x3e8] sm:$0xff]
    %v2223 = vld [vmem:[%s5 + $0x3f0] sm:$0xff]
    %v2224 = vld [vmem:[%s5 + $0x3f8] sm:$0xff]
    %v2225 = vld [vmem:[%s6] sm:$0x1]
    %v2227 = vperm.slane %v2225, 0
    %2229 = vmatpush.msra.mxu0 %v2112
    %2230 = vmatpush.msra.mxu0 %v2111
    %2231 = vmatpush.msra.mxu0 %v2110
    %2232 = vmatpush.msra.mxu0 %v2109
    %2233 = vmatpush.msra.mxu0 %v2108
    %2234 = vmatpush.msra.mxu0 %v2107
    %2235 = vmatpush.msra.mxu0 %v2106
    %2236 = vmatpush.msra.mxu0 %v2105
    %2237 = vmatpush.msra.mxu0 %v2104
    %2238 = vmatpush.msra.mxu0 %v2103
    %2239 = vmatpush.msra.mxu0 %v2102
    %2240 = vmatpush.msra.mxu0 %v2101
    %2241 = vmatpush.msra.mxu0 %v2100
    %2242 = vmatpush.msra.mxu0 %v2099
    %2243 = vmatpush.msra.mxu0 %v2098
    %2244 = vmatpush.msra.mxu0 %v2097
    %2245 = vmatmul.f32.gmra.mxu0 %v2089
    %v2246 = vpop.f32.mrf.mxu0
    %v2247 = vadd.f32 %v2227, %v2246
    %2248 = vdwg.mxu0
    %2249 = vmatpush.msra.mxu0 %v2128
    %2250 = vmatpush.msra.mxu0 %v2127
    %2251 = vmatpush.msra.mxu0 %v2126
    %2252 = vmatpush.msra.mxu0 %v2125
    %2253 = vmatpush.msra.mxu0 %v2124
    %2254 = vmatpush.msra.mxu0 %v2123
    %2255 = vmatpush.msra.mxu0 %v2122
    %2256 = vmatpush.msra.mxu0 %v2121
    %2257 = vmatpush.msra.mxu0 %v2120
    %2258 = vmatpush.msra.mxu0 %v2119
    %2259 = vmatpush.msra.mxu0 %v2118
    %2260 = vmatpush.msra.mxu0 %v2117
    %2261 = vmatpush.msra.mxu0 %v2116
    %2262 = vmatpush.msra.mxu0 %v2115
    %2263 = vmatpush.msra.mxu0 %v2114
    %2264 = vmatpush.msra.mxu0 %v2113
    %2265 = vmatmul.f32.gmra.mxu0 %v2090
    %v2266 = vpop.f32.mrf.mxu0
    %v2267 = vadd.f32 %v2247, %v2266
    %2268 = vdwg.mxu0
    %2269 = vmatpush.msra.mxu0 %v2144
    %2270 = vmatpush.msra.mxu0 %v2143
    %2271 = vmatpush.msra.mxu0 %v2142
    %2272 = vmatpush.msra.mxu0 %v2141
    %2273 = vmatpush.msra.mxu0 %v2140
    %2274 = vmatpush.msra.mxu0 %v2139
    %2275 = vmatpush.msra.mxu0 %v2138
    %2276 = vmatpush.msra.mxu0 %v2137
    %2277 = vmatpush.msra.mxu0 %v2136
    %2278 = vmatpush.msra.mxu0 %v2135
    %2279 = vmatpush.msra.mxu0 %v2134
    %2280 = vmatpush.msra.mxu0 %v2133
    %2281 = vmatpush.msra.mxu0 %v2132
    %2282 = vmatpush.msra.mxu0 %v2131
    %2283 = vmatpush.msra.mxu0 %v2130
    %2284 = vmatpush.msra.mxu0 %v2129
    %2285 = vmatmul.f32.gmra.mxu0 %v2091
    %v2286 = vpop.f32.mrf.mxu0
    %v2287 = vadd.f32 %v2267, %v2286
    %2288 = vdwg.mxu0
    %2289 = vmatpush.msra.mxu0 %v2160
    %2290 = vmatpush.msra.mxu0 %v2159
    %2291 = vmatpush.msra.mxu0 %v2158
    %2292 = vmatpush.msra.mxu0 %v2157
    %2293 = vmatpush.msra.mxu0 %v2156
    %2294 = vmatpush.msra.mxu0 %v2155
    %2295 = vmatpush.msra.mxu0 %v2154
    %2296 = vmatpush.msra.mxu0 %v2153
    %2297 = vmatpush.msra.mxu0 %v2152
    %2298 = vmatpush.msra.mxu0 %v2151
    %2299 = vmatpush.msra.mxu0 %v2150
    %2300 = vmatpush.msra.mxu0 %v2149
    %2301 = vmatpush.msra.mxu0 %v2148
    %2302 = vmatpush.msra.mxu0 %v2147
    %2303 = vmatpush.msra.mxu0 %v2146
    %2304 = vmatpush.msra.mxu0 %v2145
    %2305 = vmatmul.f32.gmra.mxu0 %v2092
    %v2306 = vpop.f32.mrf.mxu0
    %v2307 = vadd.f32 %v2287, %v2306
    %2308 = vdwg.mxu0
    %2309 = vmatpush.msra.mxu0 %v2176
    %2310 = vmatpush.msra.mxu0 %v2175
    %2311 = vmatpush.msra.mxu0 %v2174
    %2312 = vmatpush.msra.mxu0 %v2173
    %2313 = vmatpush.msra.mxu0 %v2172
    %2314 = vmatpush.msra.mxu0 %v2171
    %2315 = vmatpush.msra.mxu0 %v2170
    %2316 = vmatpush.msra.mxu0 %v2169
    %2317 = vmatpush.msra.mxu0 %v2168
    %2318 = vmatpush.msra.mxu0 %v2167
    %2319 = vmatpush.msra.mxu0 %v2166
    %2320 = vmatpush.msra.mxu0 %v2165
    %2321 = vmatpush.msra.mxu0 %v2164
    %2322 = vmatpush.msra.mxu0 %v2163
    %2323 = vmatpush.msra.mxu0 %v2162
    %2324 = vmatpush.msra.mxu0 %v2161
    %2325 = vmatmul.f32.gmra.mxu0 %v2093
    %v2326 = vpop.f32.mrf.mxu0
    %v2327 = vadd.f32 %v2307, %v2326
    %2328 = vdwg.mxu0
    %2329 = vmatpush.msra.mxu0 %v2192
    %2330 = vmatpush.msra.mxu0 %v2191
    %2331 = vmatpush.msra.mxu0 %v2190
    %2332 = vmatpush.msra.mxu0 %v2189
    %2333 = vmatpush.msra.mxu0 %v2188
    %2334 = vmatpush.msra.mxu0 %v2187
    %2335 = vmatpush.msra.mxu0 %v2186
    %2336 = vmatpush.msra.mxu0 %v2185
    %2337 = vmatpush.msra.mxu0 %v2184
    %2338 = vmatpush.msra.mxu0 %v2183
    %2339 = vmatpush.msra.mxu0 %v2182
    %2340 = vmatpush.msra.mxu0 %v2181
    %2341 = vmatpush.msra.mxu0 %v2180
    %2342 = vmatpush.msra.mxu0 %v2179
    %2343 = vmatpush.msra.mxu0 %v2178
    %2344 = vmatpush.msra.mxu0 %v2177
    %2345 = vmatmul.f32.gmra.mxu0 %v2094
    %v2346 = vpop.f32.mrf.mxu0
    %v2347 = vadd.f32 %v2327, %v2346
    %2348 = vdwg.mxu0
    %2349 = vmatpush.msra.mxu0 %v2208
    %2350 = vmatpush.msra.mxu0 %v2207
    %2351 = vmatpush.msra.mxu0 %v2206
    %2352 = vmatpush.msra.mxu0 %v2205
    %2353 = vmatpush.msra.mxu0 %v2204
    %2354 = vmatpush.msra.mxu0 %v2203
    %2355 = vmatpush.msra.mxu0 %v2202
    %2356 = vmatpush.msra.mxu0 %v2201
    %2357 = vmatpush.msra.mxu0 %v2200
    %2358 = vmatpush.msra.mxu0 %v2199
    %2359 = vmatpush.msra.mxu0 %v2198
    %2360 = vmatpush.msra.mxu0 %v2197
    %2361 = vmatpush.msra.mxu0 %v2196
    %2362 = vmatpush.msra.mxu0 %v2195
    %2363 = vmatpush.msra.mxu0 %v2194
    %2364 = vmatpush.msra.mxu0 %v2193
    %2365 = vmatmul.f32.gmra.mxu0 %v2095
    %v2366 = vpop.f32.mrf.mxu0
    %v2367 = vadd.f32 %v2347, %v2366
    %2368 = vdwg.mxu0
    %2369 = vmatpush.msra.mxu0 %v2224
    %2370 = vmatpush.msra.mxu0 %v2223
    %2371 = vmatpush.msra.mxu0 %v2222
    %2372 = vmatpush.msra.mxu0 %v2221
    %2373 = vmatpush.msra.mxu0 %v2220
    %2374 = vmatpush.msra.mxu0 %v2219
    %2375 = vmatpush.msra.mxu0 %v2218
    %2376 = vmatpush.msra.mxu0 %v2217
    %2377 = vmatpush.msra.mxu0 %v2216
    %2378 = vmatpush.msra.mxu0 %v2215
    %2379 = vmatpush.msra.mxu0 %v2214
    %2380 = vmatpush.msra.mxu0 %v2213
    %2381 = vmatpush.msra.mxu0 %v2212
    %2382 = vmatpush.msra.mxu0 %v2211
    %2383 = vmatpush.msra.mxu0 %v2210
    %2384 = vmatpush.msra.mxu0 %v2209
    %2385 = vmatmul.f32.gmra.mxu0 %v2096
    %v2386 = vpop.f32.mrf.mxu0
    %v2387 = vadd.f32 %v2367, %v2386
    %2388 = vdwg.mxu0
    %v2389 = vmax.f32 %v2387, 0.0
    %v2390 = vld [vmem:[%s7] sm:$0xff]
    %v2391 = vld [vmem:[%s7 + $0x8] sm:$0xff]
    %v2392 = vld [vmem:[%s7 + $0x10] sm:$0xff]
    %v2393 = vld [vmem:[%s7 + $0x18] sm:$0xff]
    %v2394 = vld [vmem:[%s7 + $0x20] sm:$0xff]
    %v2395 = vld [vmem:[%s7 + $0x28] sm:$0xff]
    %v2396 = vld [vmem:[%s7 + $0x30] sm:$0xff]
    %v2397 = vld [vmem:[%s7 + $0x38] sm:$0xff]
    %v2398 = vld [vmem:[%s7 + $0x40] sm:$0xff]
    %v2399 = vld [vmem:[%s7 + $0x48] sm:$0xff]
    %v2400 = vld [vmem:[%s7 + $0x50] sm:$0xff]
    %v2401 = vld [vmem:[%s7 + $0x58] sm:$0xff]
    %v2402 = vld [vmem:[%s7 + $0x60] sm:$0xff]
    %v2403 = vld [vmem:[%s7 + $0x68] sm:$0xff]
    %v2404 = vld [vmem:[%s7 + $0x70] sm:$0xff]
    %v2405 = vld [vmem:[%s7 + $0x78] sm:$0xff]
    %v2406 = vld [vmem:[%s8] sm:$0x1]
    %v2408 = vperm.slane %v2406, 0
    %2410 = vmatpush.msra.mxu0 %v2405
    %2411 = vmatpush.msra.mxu0 %v2404
    %2412 = vmatpush.msra.mxu0 %v2403
    %2413 = vmatpush.msra.mxu0 %v2402
    %2414 = vmatpush.msra.mxu0 %v2401
    %2415 = vmatpush.msra.mxu0 %v2400
    %2416 = vmatpush.msra.mxu0 %v2399
    %2417 = vmatpush.msra.mxu0 %v2398
    %2418 = vmatpush.msra.mxu0 %v2397
    %2419 = vmatpush.msra.mxu0 %v2396
    %2420 = vmatpush.msra.mxu0 %v2395
    %2421 = vmatpush.msra.mxu0 %v2394
    %2422 = vmatpush.msra.mxu0 %v2393
    %2423 = vmatpush.msra.mxu0 %v2392
    %2424 = vmatpush.msra.mxu0 %v2391
    %2425 = vmatpush.msra.mxu0 %v2390
    %2426 = vmatmul.f32.gmra.mxu0 %v2389
    %v2427 = vpop.f32.mrf.mxu0
    %v2428 = vadd.f32 %v2408, %v2427
    %2429 = vdwg.mxu0
    %v2430 = vmax.f32 %v2428, 0.0
    %v2431 = vld [vmem:[%s9] sm:$0xff]
    %v2432 = vld [vmem:[%s9 + $0x8] sm:$0xff]
    %v2433 = vld [vmem:[%s9 + $0x10] sm:$0xff]
    %v2434 = vld [vmem:[%s9 + $0x18] sm:$0xff]
    %v2435 = vld [vmem:[%s9 + $0x20] sm:$0xff]
    %v2436 = vld [vmem:[%s9 + $0x28] sm:$0xff]
    %v2437 = vld [vmem:[%s9 + $0x30] sm:$0xff]
    %v2438 = vld [vmem:[%s9 + $0x38] sm:$0xff]
    %v2439 = vld [vmem:[%s10] sm:$0x1]
    %v2441 = vperm.slane %v2439, 0
    %v2444 = vsel %vm1463, %v2430, 0
    %2446 = vmatpush.msra.mxu0 0.0
    %2447 = vmatpush.msra.mxu0 0.0
    %2448 = vmatpush.msra.mxu0 0.0
    %2449 = vmatpush.msra.mxu0 0.0
    %2450 = vmatpush.msra.mxu0 0.0
    %2451 = vmatpush.msra.mxu0 0.0
    %2452 = vmatpush.msra.mxu0 0.0
    %2453 = vmatpush.msra.mxu0 0.0
    %2454 = vmatpush.msra.mxu0 %v2438
    %2455 = vmatpush.msra.mxu0 %v2437
    %2456 = vmatpush.msra.mxu0 %v2436
    %2457 = vmatpush.msra.mxu0 %v2435
    %2458 = vmatpush.msra.mxu0 %v2434
    %2459 = vmatpush.msra.mxu0 %v2433
    %2460 = vmatpush.msra.mxu0 %v2432
    %2461 = vmatpush.msra.mxu0 %v2431
    %2462 = vmatmul.f32.gmra.mxu0 %v2444
    %v2463 = vpop.f32.mrf.mxu0
    %v2464 = vadd.f32 %v2441, %v2463
    %2465 = vdwg.mxu0
    %v2466 = vmax.f32 %v2464, 0.0
    %v2467 = vld [vmem:[%s11] sm:$0xff]
    %v2468 = vld [vmem:[%s11 + $0x8] sm:$0xff]
    %v2469 = vld [vmem:[%s11 + $0x10] sm:$0xff]
    %v2470 = vld [vmem:[%s11 + $0x18] sm:$0xff]
    %v2471 = vld [vmem:[%s12] sm:$0x1]
    %v2473 = vperm.slane %v2471, 0
    %v2476 = vsel %vm587, %v2466, 0
    %2478 = vmatpush.msra.mxu0 0.0
    %2479 = vmatpush.msra.mxu0 0.0
    %2480 = vmatpush.msra.mxu0 0.0
    %2481 = vmatpush.msra.mxu0 0.0
    %2482 = vmatpush.msra.mxu0 0.0
    %2483 = vmatpush.msra.mxu0 0.0
    %2484 = vmatpush.msra.mxu0 0.0
    %2485 = vmatpush.msra.mxu0 0.0
    %2486 = vmatpush.msra.mxu0 0.0
    %2487 = vmatpush.msra.mxu0 0.0
    %2488 = vmatpush.msra.mxu0 0.0
    %2489 = vmatpush.msra.mxu0 0.0
    %2490 = vmatpush.msra.mxu0 %v2470
    %2491 = vmatpush.msra.mxu0 %v2469
    %2492 = vmatpush.msra.mxu0 %v2468
    %2493 = vmatpush.msra.mxu0 %v2467
    %2494 = vmatmul.f32.gmra.mxu0 %v2476
    %v2495 = vpop.f32.mrf.mxu0
    %v2496 = vadd.f32 %v2473, %v2495
    %2497 = vdwg.mxu0
    %vm2498 = vcmask 25600
    %2499 = vst.msk [vmem:[#allocation7] sm:$0x3] %vm2498, %v2496
    // Predicated region
    $region54: #{net_forward.1} parent=1 // pred_check
      _
    $region55: #{net_forward.1} parent=1 // pred_check_branch
      %2501 = sbr.rel (0) target = $region57
    $region56: #{net_forward.1} parent=1 // pred_region
      %2503 = vsyncadd [#allocation8], 0
      %s2505 = sshll.u32 [#allocation7], 4
      %s2506 = int_to_ptr.vmem [resolvable:$true] %s2505
      %s2507 = sshll.u32 %s13, 4
      %s2508 = int_to_ptr.hbm [resolvable:$true] %s2507
      %2510 = dma.vmem_to_hbm [thread:$0]  %s2506, 32, %s2508, [#allocation8]
    $region57: #{net_forward.1} parent=1 // pred_fallthru
      _
    // Predicated region
    $region58: #{net_forward.1} parent=1 // pred_check
      _
    $region59: #{net_forward.1} parent=1 // pred_check_branch
      %2512 = sbr.rel (0) target = $region61
    $region60: #{net_forward.1} parent=1 // pred_region
      %2514 = dma.done [#allocation8], 32
    $region61: #{net_forward.1} parent=1 // pred_fallthru
      _
    %2515 = vsyncpa [#allocation8], 1

</llo_original>
